<compile_context>
chip_gen: v6e
topology: v6e:2x2x1
jax: 0.10.0
libtpu: 0.0.40
codegen_flags: <defaults>
</compile_context>

<pallas_src>
import numpy as np
import jax
import jax.numpy as jnp
from jax import lax
from jax.experimental import pallas as pl
from jax.experimental.pallas import tpu as pltpu


def _make_lstm_kernel(num_layers: int, seq_len: int, hidden: int, batch_padded: int):
    """Builds a Pallas kernel closure for fixed num_layers / seq_len / hidden / padded batch.

    Weight layout expected from the wrapper (per layer):
      w_ih: (D_l, 4H), w_hh: (H, 4H), b: (1, 4H)
      with gate columns ordered (i, f, o, g) and the i/f/o columns pre-scaled by 0.5
      (so sigmoid(z) can be computed as 0.5*tanh(0.5*z) + 0.5 with one wide tanh).
    """
    T, H, Bp = seq_len, hidden, batch_padded

    def kernel(*refs):
        # refs layout:
        #   x_ref,                                  (T*Bp, D_in)   flat time-major input
        #   [w_ih_l, w_hh_l, b_l] * num_layers,     (D_l, 4H), (H, 4H), (1, 4H)
        #   w_fc,                                   (1, H)
        #   y_ref,                                  (Bp, 1)        -- output
        #   hseq_ref,                               (T*Bp, H)      -- VMEM scratch (layer output)
        #   gx_ref                                  (T*Bp, 4H)     -- VMEM scratch (hoisted gates_x)
        idx = 0
        x_ref = refs[idx]; idx += 1
        layer_refs = []
        for _ in range(num_layers):
            layer_refs.append((refs[idx], refs[idx + 1], refs[idx + 2]))
            idx += 3
        w_fc_ref = refs[idx]; idx += 1
        y_ref = refs[idx]; idx += 1
        hseq_ref = refs[idx]; idx += 1
        gx_ref = refs[idx]

        h_last = None
        for layer in range(num_layers):
            w_ih_ref, w_hh_ref, b_ref = layer_refs[layer]
            w_hh = w_hh_ref[...]                          # (H, 4H), gate cols (i,f,o,g), i/f/o *0.5

            # ---- Hoisted input projection: one big MXU matmul, bias folded in once. ----
            # For layer >= 1 this reads ALL of hseq_ref before the loop below overwrites it
            # (Pallas preserves program order of effects on the same ref -- keep it hoisted).
            if layer == 0:
                xin = x_ref[...]                          # (T*Bp, D_in)
            else:
                xin = hseq_ref[...]                       # (T*Bp, H) -- previous layer's output
            gx_ref[...] = (
                jnp.dot(xin, w_ih_ref[...], preferred_element_type=jnp.float32)
                + b_ref[...]
            )                                             # (T*Bp, 4H)

            write_h = (layer != num_layers - 1)

            # ---- Recurrent loop: only h @ W_hh + gates_x[t] + 2 EUP calls on the chain. ----
            def step(t, carry, _w_hh=w_hh, _write_h=write_h):
                h, c = carry
                row = pl.multiple_of(t * Bp, 8)           # 8-aligned sublane window
                gates = gx_ref[pl.ds(row, Bp), :] + jnp.dot(
                    h, _w_hh, preferred_element_type=jnp.float32)   # (Bp, 4H)
                # ONE wide tanh over the full (Bp, 4H) vreg (EUP); sigmoid lanes were pre-scaled
                # by 0.5 in the weights so sigmoid(z) = 0.5*tanh(z/2) + 0.5 (VPU fix-up below).
                acts = jnp.tanh(gates)
                i_g = 0.5 * acts[:, 0 * H:1 * H] + 0.5
                f_g = 0.5 * acts[:, 1 * H:2 * H] + 0.5
                o_g = 0.5 * acts[:, 2 * H:3 * H] + 0.5
                g_g = acts[:, 3 * H:4 * H]
                c_new = f_g * c + i_g * g_g
                h_new = o_g * jnp.tanh(c_new)
                if _write_h:                              # last layer: skip the store
                    hseq_ref[pl.ds(row, Bp), :] = h_new
                return (h_new, c_new)

            h0 = jnp.zeros((Bp, H), jnp.float32)
            c0 = jnp.zeros((Bp, H), jnp.float32)
            h_last, _ = lax.fori_loop(0, T, step, (h0, c0), unroll=True)

        # ---- fc head: elementwise mul + lane reduction (avoids an N=1 MXU matmul). ----
        y_ref[...] = jnp.sum(h_last * w_fc_ref[...], axis=-1, keepdims=True)

    return kernel


def _full_spec(shape):
    nd = len(shape)
    return pl.BlockSpec(shape, lambda i, _nd=nd: (0,) * _nd)


def _prep_layer_weights(w_ih, w_hh, b_ih, b_hh, H):
    """Reorder PyTorch gate rows (i,f,g,o) -> (i,f,o,g), pre-scale i/f/o rows by 0.5,
    transpose to (D_in, 4H)/(H, 4H), fold the two biases into one (1, 4H) row."""
    perm = np.concatenate([np.arange(0, 2 * H),            # i, f
                           np.arange(3 * H, 4 * H),         # o
                           np.arange(2 * H, 3 * H)])         # g
    row_scale = np.concatenate([np.full(3 * H, 0.5, np.float32),
                                np.ones(H, np.float32)])
    w_ih = np.asarray(w_ih, np.float32)[perm, :] * row_scale[:, None]
    w_hh = np.asarray(w_hh, np.float32)[perm, :] * row_scale[:, None]
    b = (np.asarray(b_ih, np.float32) + np.asarray(b_hh, np.float32))[perm] * row_scale
    return (jnp.asarray(w_ih.T), jnp.asarray(w_hh.T), jnp.asarray(b[None, :]))


def lstm_model_forward(x, lstm_params, fc_params):
    """x: (B, T, input_size) batch-first, like the PyTorch module.

    lstm_params: list of (w_ih (4H, D_l), w_hh (4H, H), b_ih (4H,), b_hh (4H,))
    fc_params:   (w_fc (1, H), b_fc (1,))
    Returns (B, 1) float32.
    """
    x = jnp.asarray(x, jnp.float32)
    B, T, D = x.shape
    num_layers = len(lstm_params)
    H = lstm_params[0][1].shape[1]

    # Pad batch up to a multiple of 8 (sublane) so per-step vregs and stores are dense.
    Bp = max(8, int(np.ceil(B / 8)) * 8)
    if Bp != B:
        x = jnp.pad(x, ((0, Bp - B), (0, 0), (0, 0)))

    # time-major, flattened to (T*Bp, D) so the kernel needs no reshapes.
    x_flat = jnp.transpose(x, (1, 0, 2)).reshape(T * Bp, D)

    kernel_inputs = [x_flat]
    in_specs = [_full_spec(x_flat.shape)]
    for (w_ih, w_hh, b_ih, b_hh) in lstm_params:
        w_ih_t, w_hh_t, b = _prep_layer_weights(w_ih, w_hh, b_ih, b_hh, H)
        kernel_inputs += [w_ih_t, w_hh_t, b]
        in_specs += [_full_spec(w_ih_t.shape),
                     _full_spec(w_hh_t.shape),
                     _full_spec(b.shape)]

    w_fc, b_fc = fc_params
    w_fc_row = jnp.asarray(w_fc, jnp.float32).reshape(1, H)  # (1, H)
    kernel_inputs += [w_fc_row]
    in_specs += [_full_spec(w_fc_row.shape)]

    kernel = _make_lstm_kernel(num_layers, T, H, Bp)

    y_pad = pl.pallas_call(
        kernel,
        out_shape=jax.ShapeDtypeStruct((Bp, 1), jnp.float32),
        grid=(1,),
        in_specs=in_specs,
        out_specs=_full_spec((Bp, 1)),
        scratch_shapes=[pltpu.VMEM((T * Bp, H), jnp.float32),       # previous-layer outputs
                        pltpu.VMEM((T * Bp, 4 * H), jnp.float32)],  # hoisted gates_x
        compiler_params=pltpu.CompilerParams(
            dimension_semantics=("arbitrary",)),
    )(*kernel_inputs)

    # fc bias added here as a scalar (no (1,1) VMEM tensor in the kernel); slice off padding.
    b_fc_val = jnp.asarray(b_fc, jnp.float32).reshape(1, 1)
    return y_pad[:B] + b_fc_val


def init_params(key, input_size, hidden_size, num_layers):
    """Deterministic init matching PyTorch LSTM/Linear parameter shapes."""
    scale = 1.0 / np.sqrt(hidden_size)
    lstm_params = []
    for layer in range(num_layers):
        d_in = input_size if layer == 0 else hidden_size
        key, k1, k2, k3, k4 = jax.random.split(key, 5)
        w_ih = jax.random.uniform(k1, (4 * hidden_size, d_in), jnp.float32,
                                  -scale, scale)
        w_hh = jax.random.uniform(k2, (4 * hidden_size, hidden_size), jnp.float32,
                                  -scale, scale)
        b_ih = jax.random.uniform(k3, (4 * hidden_size,), jnp.float32, -scale, scale)
        b_hh = jax.random.uniform(k4, (4 * hidden_size,), jnp.float32, -scale, scale)
        lstm_params.append((w_ih, w_hh, b_ih, b_hh))
    key, k1, k2 = jax.random.split(key, 3)
    fc_scale = 1.0 / np.sqrt(hidden_size)
    w_fc = jax.random.uniform(k1, (1, hidden_size), jnp.float32, -fc_scale, fc_scale)
    b_fc = jax.random.uniform(k2, (1,), jnp.float32, -fc_scale, fc_scale)
    return lstm_params, (w_fc, b_fc)


def reference_forward(x, lstm_params, fc_params):
    """Pure-JAX reference reproducing nn.LSTM (batch_first) + fc semantics (PyTorch gate order)."""
    x = jnp.asarray(x, jnp.float32)
    B, T, _ = x.shape
    layer_in = x
    for (w_ih, w_hh, b_ih, b_hh) in lstm_params:
        H = w_hh.shape[1]
        h = jnp.zeros((B, H), jnp.float32)
        c = jnp.zeros((B, H), jnp.float32)
        outs = []
        for t in range(T):
            gates = layer_in[:, t, :] @ w_ih.T + b_ih + h @ w_hh.T + b_hh
            i_g = jax.nn.sigmoid(gates[:, 0 * H:1 * H])
            f_g = jax.nn.sigmoid(gates[:, 1 * H:2 * H])
            g_g = jnp.tanh(gates[:, 2 * H:3 * H])
            o_g = jax.nn.sigmoid(gates[:, 3 * H:4 * H])
            c = f_g * c + i_g * g_g
            h = o_g * jnp.tanh(c)
            outs.append(h)
        layer_in = jnp.stack(outs, axis=1)
    w_fc, b_fc = fc_params
    return layer_in[:, -1, :] @ w_fc.T + b_fc


if __name__ == "__main__":
    batch, seq, input_size, hidden_size, num_layers = 2, 8, 4, 32, 2

    key = jax.random.PRNGKey(0)
    key, kx, kp = jax.random.split(key, 3)
    x = jax.random.normal(kx, (batch, seq, input_size), jnp.float32)
    lstm_params, fc_params = init_params(kp, input_size, hidden_size, num_layers)

    y = lstm_model_forward(x, lstm_params, fc_params)
    y = jax.block_until_ready(y)

    y_ref = reference_forward(x, lstm_params, fc_params)
    assert y.shape == (batch, 1)
    np.testing.assert_allclose(np.asarray(y), np.asarray(y_ref),
                               rtol=1e-4, atol=1e-4)
    print("KERNEL_OK")
</pallas_src>

<mosaic_0001>
module attributes {stable_mosaic.version = 11 : i64} {
  func.func @kernel(%arg0: i32, %arg1: memref<64x4xf32, #tpu.memory_space<vmem>>, %arg2: memref<4x128xf32, #tpu.memory_space<vmem>>, %arg3: memref<32x128xf32, #tpu.memory_space<vmem>>, %arg4: memref<1x128xf32, #tpu.memory_space<vmem>>, %arg5: memref<32x128xf32, #tpu.memory_space<vmem>>, %arg6: memref<32x128xf32, #tpu.memory_space<vmem>>, %arg7: memref<1x128xf32, #tpu.memory_space<vmem>>, %arg8: memref<1x32xf32, #tpu.memory_space<vmem>>, %arg9: memref<8x1xf32, #tpu.memory_space<vmem>>, %arg10: memref<64x32xf32, #tpu.memory_space<vmem>>, %arg11: memref<64x128xf32, #tpu.memory_space<vmem>>) attributes {dimension_semantics = [#tpu.dimension_semantics<arbitrary>], iteration_bounds = array<i64: 1>, scalar_prefetch = 0 : i64, scratch_operands = 2 : i64, tpu.core_type = #tpu.core_type<tc>, window_params = [{pipeline_mode = #tpu.pipeline_mode<synchronous>, transform_indices = @transform_0, window_bounds = array<i64: 64, 4>}, {pipeline_mode = #tpu.pipeline_mode<synchronous>, transform_indices = @transform_1, window_bounds = array<i64: 4, 128>}, {pipeline_mode = #tpu.pipeline_mode<synchronous>, transform_indices = @transform_2, window_bounds = array<i64: 32, 128>}, {pipeline_mode = #tpu.pipeline_mode<synchronous>, transform_indices = @transform_3, window_bounds = array<i64: 1, 128>}, {pipeline_mode = #tpu.pipeline_mode<synchronous>, transform_indices = @transform_4, window_bounds = array<i64: 32, 128>}, {pipeline_mode = #tpu.pipeline_mode<synchronous>, transform_indices = @transform_5, window_bounds = array<i64: 32, 128>}, {pipeline_mode = #tpu.pipeline_mode<synchronous>, transform_indices = @transform_6, window_bounds = array<i64: 1, 128>}, {pipeline_mode = #tpu.pipeline_mode<synchronous>, transform_indices = @transform_7, window_bounds = array<i64: 1, 32>}, {pipeline_mode = #tpu.pipeline_mode<synchronous>, transform_indices = @transform_8, window_bounds = array<i64: 8, 1>}]} {
    %c0 = arith.constant 0 : index
    %c0_0 = arith.constant 0 : index
    %0 = vector.load %arg3[%c0, %c0_0] : memref<32x128xf32, #tpu.memory_space<vmem>>, vector<32x128xf32>
    %c0_1 = arith.constant 0 : index
    %c0_2 = arith.constant 0 : index
    %1 = vector.load %arg1[%c0_1, %c0_2] : memref<64x4xf32, #tpu.memory_space<vmem>>, vector<64x4xf32>
    %c0_3 = arith.constant 0 : index
    %c0_4 = arith.constant 0 : index
    %2 = vector.load %arg2[%c0_3, %c0_4] : memref<4x128xf32, #tpu.memory_space<vmem>>, vector<4x128xf32>
    %cst = arith.constant dense<0.000000e+00> : vector<64x128xf32>
    %3 = tpu.matmul %1, %2, %cst {dimension_numbers = #tpu.dot_dimension_numbers<[1], [0], [0], [1], [0, 0, 1, 1], [], []>} : vector<64x4xf32>, vector<4x128xf32>, vector<64x128xf32> -> vector<64x128xf32>
    %c0_5 = arith.constant 0 : index
    %c0_6 = arith.constant 0 : index
    %4 = vector.load %arg4[%c0_5, %c0_6] : memref<1x128xf32, #tpu.memory_space<vmem>>, vector<1x128xf32>
    %5 = vector.broadcast %4 : vector<1x128xf32> to vector<64x128xf32>
    %6 = arith.addf %3, %5 : vector<64x128xf32>
    %c0_7 = arith.constant 0 : index
    %c0_8 = arith.constant 0 : index
    %7 = vector.load %arg11[%c0_7, %c0_8] : memref<64x128xf32, #tpu.memory_space<vmem>>, vector<64x128xf32>
    tpu.vector_store %arg11[%c0_7, %c0_8], %6 {strides = array<i32>} : memref<64x128xf32, #tpu.memory_space<vmem>>, vector<64x128xf32>,
    %cst_9 = arith.constant 0.000000e+00 : f32
    %8 = vector.broadcast %cst_9 : f32 to vector<8x32xf32>
    %cst_10 = arith.constant 0.000000e+00 : f32
    %9 = vector.broadcast %cst_10 : f32 to vector<8x32xf32>
    %c0_i32 = arith.constant 0 : i32
    %c8_i32 = arith.constant 8 : i32
    %10 = arith.muli %c0_i32, %c8_i32 : i32
    %11 = tpu.assume_multiple %10, 8 : i32
    %12 = arith.index_cast %11 : i32 to index
    %c0_11 = arith.constant 0 : index
    %13 = vector.load %arg11[%12, %c0_11] : memref<64x128xf32, #tpu.memory_space<vmem>>, vector<8x128xf32>
    %cst_12 = arith.constant dense<0.000000e+00> : vector<8x128xf32>
    %14 = tpu.matmul %8, %0, %cst_12 {dimension_numbers = #tpu.dot_dimension_numbers<[1], [0], [0], [1], [0, 0, 1, 1], [], []>} : vector<8x32xf32>, vector<32x128xf32>, vector<8x128xf32> -> vector<8x128xf32>
    %15 = arith.addf %13, %14 : vector<8x128xf32>
    %16 = math.tanh %15 : vector<8x128xf32>
    %17 = vector.extract_strided_slice %16 {offsets = [0, 0], sizes = [8, 32], strides = [1, 1]} : vector<8x128xf32> to vector<8x32xf32>
    %cst_13 = arith.constant 5.000000e-01 : f32
    %18 = vector.broadcast %cst_13 : f32 to vector<8x32xf32>
    %19 = arith.mulf %18, %17 : vector<8x32xf32>
    %cst_14 = arith.constant 5.000000e-01 : f32
    %20 = vector.broadcast %cst_14 : f32 to vector<8x32xf32>
    %21 = arith.addf %19, %20 : vector<8x32xf32>
    %22 = vector.extract_strided_slice %16 {offsets = [0, 32], sizes = [8, 32], strides = [1, 1]} : vector<8x128xf32> to vector<8x32xf32>
    %cst_15 = arith.constant 5.000000e-01 : f32
    %23 = vector.broadcast %cst_15 : f32 to vector<8x32xf32>
    %24 = arith.mulf %23, %22 : vector<8x32xf32>
    %cst_16 = arith.constant 5.000000e-01 : f32
    %25 = vector.broadcast %cst_16 : f32 to vector<8x32xf32>
    %26 = arith.addf %24, %25 : vector<8x32xf32>
    %27 = vector.extract_strided_slice %16 {offsets = [0, 64], sizes = [8, 32], strides = [1, 1]} : vector<8x128xf32> to vector<8x32xf32>
    %cst_17 = arith.constant 5.000000e-01 : f32
    %28 = vector.broadcast %cst_17 : f32 to vector<8x32xf32>
    %29 = arith.mulf %28, %27 : vector<8x32xf32>
    %cst_18 = arith.constant 5.000000e-01 : f32
    %30 = vector.broadcast %cst_18 : f32 to vector<8x32xf32>
    %31 = arith.addf %29, %30 : vector<8x32xf32>
    %32 = vector.extract_strided_slice %16 {offsets = [0, 96], sizes = [8, 32], strides = [1, 1]} : vector<8x128xf32> to vector<8x32xf32>
    %33 = arith.mulf %26, %9 : vector<8x32xf32>
    %34 = arith.mulf %21, %32 : vector<8x32xf32>
    %35 = arith.addf %33, %34 : vector<8x32xf32>
    %36 = math.tanh %35 : vector<8x32xf32>
    %37 = arith.mulf %31, %36 : vector<8x32xf32>
    %38 = arith.index_cast %11 : i32 to index
    %c0_19 = arith.constant 0 : index
    %39 = vector.load %arg10[%38, %c0_19] : memref<64x32xf32, #tpu.memory_space<vmem>>, vector<8x32xf32>
    tpu.vector_store %arg10[%38, %c0_19], %37 {strides = array<i32>} : memref<64x32xf32, #tpu.memory_space<vmem>>, vector<8x32xf32>,
    %c1_i32 = arith.constant 1 : i32
    %c8_i32_20 = arith.constant 8 : i32
    %40 = arith.muli %c1_i32, %c8_i32_20 : i32
    %41 = tpu.assume_multiple %40, 8 : i32
    %42 = arith.index_cast %41 : i32 to index
    %c0_21 = arith.constant 0 : index
    %43 = vector.load %arg11[%42, %c0_21] : memref<64x128xf32, #tpu.memory_space<vmem>>, vector<8x128xf32>
    %cst_22 = arith.constant dense<0.000000e+00> : vector<8x128xf32>
    %44 = tpu.matmul %37, %0, %cst_22 {dimension_numbers = #tpu.dot_dimension_numbers<[1], [0], [0], [1], [0, 0, 1, 1], [], []>} : vector<8x32xf32>, vector<32x128xf32>, vector<8x128xf32> -> vector<8x128xf32>
    %45 = arith.addf %43, %44 : vector<8x128xf32>
    %46 = math.tanh %45 : vector<8x128xf32>
    %47 = vector.extract_strided_slice %46 {offsets = [0, 0], sizes = [8, 32], strides = [1, 1]} : vector<8x128xf32> to vector<8x32xf32>
    %cst_23 = arith.constant 5.000000e-01 : f32
    %48 = vector.broadcast %cst_23 : f32 to vector<8x32xf32>
    %49 = arith.mulf %48, %47 : vector<8x32xf32>
    %cst_24 = arith.constant 5.000000e-01 : f32
    %50 = vector.broadcast %cst_24 : f32 to vector<8x32xf32>
    %51 = arith.addf %49, %50 : vector<8x32xf32>
    %52 = vector.extract_strided_slice %46 {offsets = [0, 32], sizes = [8, 32], strides = [1, 1]} : vector<8x128xf32> to vector<8x32xf32>
    %cst_25 = arith.constant 5.000000e-01 : f32
    %53 = vector.broadcast %cst_25 : f32 to vector<8x32xf32>
    %54 = arith.mulf %53, %52 : vector<8x32xf32>
    %cst_26 = arith.constant 5.000000e-01 : f32
    %55 = vector.broadcast %cst_26 : f32 to vector<8x32xf32>
    %56 = arith.addf %54, %55 : vector<8x32xf32>
    %57 = vector.extract_strided_slice %46 {offsets = [0, 64], sizes = [8, 32], strides = [1, 1]} : vector<8x128xf32> to vector<8x32xf32>
    %cst_27 = arith.constant 5.000000e-01 : f32
    %58 = vector.broadcast %cst_27 : f32 to vector<8x32xf32>
    %59 = arith.mulf %58, %57 : vector<8x32xf32>
    %cst_28 = arith.constant 5.000000e-01 : f32
    %60 = vector.broadcast %cst_28 : f32 to vector<8x32xf32>
    %61 = arith.addf %59, %60 : vector<8x32xf32>
    %62 = vector.extract_strided_slice %46 {offsets = [0, 96], sizes = [8, 32], strides = [1, 1]} : vector<8x128xf32> to vector<8x32xf32>
    %63 = arith.mulf %56, %35 : vector<8x32xf32>
    %64 = arith.mulf %51, %62 : vector<8x32xf32>
    %65 = arith.addf %63, %64 : vector<8x32xf32>
    %66 = math.tanh %65 : vector<8x32xf32>
    %67 = arith.mulf %61, %66 : vector<8x32xf32>
    %68 = arith.index_cast %41 : i32 to index
    %c0_29 = arith.constant 0 : index
    %69 = vector.load %arg10[%68, %c0_29] : memref<64x32xf32, #tpu.memory_space<vmem>>, vector<8x32xf32>
    tpu.vector_store %arg10[%68, %c0_29], %67 {strides = array<i32>} : memref<64x32xf32, #tpu.memory_space<vmem>>, vector<8x32xf32>,
    %c2_i32 = arith.constant 2 : i32
    %c8_i32_30 = arith.constant 8 : i32
    %70 = arith.muli %c2_i32, %c8_i32_30 : i32
    %71 = tpu.assume_multiple %70, 8 : i32
    %72 = arith.index_cast %71 : i32 to index
    %c0_31 = arith.constant 0 : index
    %73 = vector.load %arg11[%72, %c0_31] : memref<64x128xf32, #tpu.memory_space<vmem>>, vector<8x128xf32>
    %cst_32 = arith.constant dense<0.000000e+00> : vector<8x128xf32>
    %74 = tpu.matmul %67, %0, %cst_32 {dimension_numbers = #tpu.dot_dimension_numbers<[1], [0], [0], [1], [0, 0, 1, 1], [], []>} : vector<8x32xf32>, vector<32x128xf32>, vector<8x128xf32> -> vector<8x128xf32>
    %75 = arith.addf %73, %74 : vector<8x128xf32>
    %76 = math.tanh %75 : vector<8x128xf32>
    %77 = vector.extract_strided_slice %76 {offsets = [0, 0], sizes = [8, 32], strides = [1, 1]} : vector<8x128xf32> to vector<8x32xf32>
    %cst_33 = arith.constant 5.000000e-01 : f32
    %78 = vector.broadcast %cst_33 : f32 to vector<8x32xf32>
    %79 = arith.mulf %78, %77 : vector<8x32xf32>
    %cst_34 = arith.constant 5.000000e-01 : f32
    %80 = vector.broadcast %cst_34 : f32 to vector<8x32xf32>
    %81 = arith.addf %79, %80 : vector<8x32xf32>
    %82 = vector.extract_strided_slice %76 {offsets = [0, 32], sizes = [8, 32], strides = [1, 1]} : vector<8x128xf32> to vector<8x32xf32>
    %cst_35 = arith.constant 5.000000e-01 : f32
    %83 = vector.broadcast %cst_35 : f32 to vector<8x32xf32>
    %84 = arith.mulf %83, %82 : vector<8x32xf32>
    %cst_36 = arith.constant 5.000000e-01 : f32
    %85 = vector.broadcast %cst_36 : f32 to vector<8x32xf32>
    %86 = arith.addf %84, %85 : vector<8x32xf32>
    %87 = vector.extract_strided_slice %76 {offsets = [0, 64], sizes = [8, 32], strides = [1, 1]} : vector<8x128xf32> to vector<8x32xf32>
    %cst_37 = arith.constant 5.000000e-01 : f32
    %88 = vector.broadcast %cst_37 : f32 to vector<8x32xf32>
    %89 = arith.mulf %88, %87 : vector<8x32xf32>
    %cst_38 = arith.constant 5.000000e-01 : f32
    %90 = vector.broadcast %cst_38 : f32 to vector<8x32xf32>
    %91 = arith.addf %89, %90 : vector<8x32xf32>
    %92 = vector.extract_strided_slice %76 {offsets = [0, 96], sizes = [8, 32], strides = [1, 1]} : vector<8x128xf32> to vector<8x32xf32>
    %93 = arith.mulf %86, %65 : vector<8x32xf32>
    %94 = arith.mulf %81, %92 : vector<8x32xf32>
    %95 = arith.addf %93, %94 : vector<8x32xf32>
    %96 = math.tanh %95 : vector<8x32xf32>
    %97 = arith.mulf %91, %96 : vector<8x32xf32>
    %98 = arith.index_cast %71 : i32 to index
    %c0_39 = arith.constant 0 : index
    %99 = vector.load %arg10[%98, %c0_39] : memref<64x32xf32, #tpu.memory_space<vmem>>, vector<8x32xf32>
    tpu.vector_store %arg10[%98, %c0_39], %97 {strides = array<i32>} : memref<64x32xf32, #tpu.memory_space<vmem>>, vector<8x32xf32>,
    %c3_i32 = arith.constant 3 : i32
    %c8_i32_40 = arith.constant 8 : i32
    %100 = arith.muli %c3_i32, %c8_i32_40 : i32
    %101 = tpu.assume_multiple %100, 8 : i32
    %102 = arith.index_cast %101 : i32 to index
    %c0_41 = arith.constant 0 : index
    %103 = vector.load %arg11[%102, %c0_41] : memref<64x128xf32, #tpu.memory_space<vmem>>, vector<8x128xf32>
    %cst_42 = arith.constant dense<0.000000e+00> : vector<8x128xf32>
    %104 = tpu.matmul %97, %0, %cst_42 {dimension_numbers = #tpu.dot_dimension_numbers<[1], [0], [0], [1], [0, 0, 1, 1], [], []>} : vector<8x32xf32>, vector<32x128xf32>, vector<8x128xf32> -> vector<8x128xf32>
    %105 = arith.addf %103, %104 : vector<8x128xf32>
    %106 = math.tanh %105 : vector<8x128xf32>
    %107 = vector.extract_strided_slice %106 {offsets = [0, 0], sizes = [8, 32], strides = [1, 1]} : vector<8x128xf32> to vector<8x32xf32>
    %cst_43 = arith.constant 5.000000e-01 : f32
    %108 = vector.broadcast %cst_43 : f32 to vector<8x32xf32>
    %109 = arith.mulf %108, %107 : vector<8x32xf32>
    %cst_44 = arith.constant 5.000000e-01 : f32
    %110 = vector.broadcast %cst_44 : f32 to vector<8x32xf32>
    %111 = arith.addf %109, %110 : vector<8x32xf32>
    %112 = vector.extract_strided_slice %106 {offsets = [0, 32], sizes = [8, 32], strides = [1, 1]} : vector<8x128xf32> to vector<8x32xf32>
    %cst_45 = arith.constant 5.000000e-01 : f32
    %113 = vector.broadcast %cst_45 : f32 to vector<8x32xf32>
    %114 = arith.mulf %113, %112 : vector<8x32xf32>
    %cst_46 = arith.constant 5.000000e-01 : f32
    %115 = vector.broadcast %cst_46 : f32 to vector<8x32xf32>
    %116 = arith.addf %114, %115 : vector<8x32xf32>
    %117 = vector.extract_strided_slice %106 {offsets = [0, 64], sizes = [8, 32], strides = [1, 1]} : vector<8x128xf32> to vector<8x32xf32>
    %cst_47 = arith.constant 5.000000e-01 : f32
    %118 = vector.broadcast %cst_47 : f32 to vector<8x32xf32>
    %119 = arith.mulf %118, %117 : vector<8x32xf32>
    %cst_48 = arith.constant 5.000000e-01 : f32
    %120 = vector.broadcast %cst_48 : f32 to vector<8x32xf32>
    %121 = arith.addf %119, %120 : vector<8x32xf32>
    %122 = vector.extract_strided_slice %106 {offsets = [0, 96], sizes = [8, 32], strides = [1, 1]} : vector<8x128xf32> to vector<8x32xf32>
    %123 = arith.mulf %116, %95 : vector<8x32xf32>
    %124 = arith.mulf %111, %122 : vector<8x32xf32>
    %125 = arith.addf %123, %124 : vector<8x32xf32>
    %126 = math.tanh %125 : vector<8x32xf32>
    %127 = arith.mulf %121, %126 : vector<8x32xf32>
    %128 = arith.index_cast %101 : i32 to index
    %c0_49 = arith.constant 0 : index
    %129 = vector.load %arg10[%128, %c0_49] : memref<64x32xf32, #tpu.memory_space<vmem>>, vector<8x32xf32>
    tpu.vector_store %arg10[%128, %c0_49], %127 {strides = array<i32>} : memref<64x32xf32, #tpu.memory_space<vmem>>, vector<8x32xf32>,
    %c4_i32 = arith.constant 4 : i32
    %c8_i32_50 = arith.constant 8 : i32
    %130 = arith.muli %c4_i32, %c8_i32_50 : i32
    %131 = tpu.assume_multiple %130, 8 : i32
    %132 = arith.index_cast %131 : i32 to index
    %c0_51 = arith.constant 0 : index
    %133 = vector.load %arg11[%132, %c0_51] : memref<64x128xf32, #tpu.memory_space<vmem>>, vector<8x128xf32>
    %cst_52 = arith.constant dense<0.000000e+00> : vector<8x128xf32>
    %134 = tpu.matmul %127, %0, %cst_52 {dimension_numbers = #tpu.dot_dimension_numbers<[1], [0], [0], [1], [0, 0, 1, 1], [], []>} : vector<8x32xf32>, vector<32x128xf32>, vector<8x128xf32> -> vector<8x128xf32>
    %135 = arith.addf %133, %134 : vector<8x128xf32>
    %136 = math.tanh %135 : vector<8x128xf32>
    %137 = vector.extract_strided_slice %136 {offsets = [0, 0], sizes = [8, 32], strides = [1, 1]} : vector<8x128xf32> to vector<8x32xf32>
    %cst_53 = arith.constant 5.000000e-01 : f32
    %138 = vector.broadcast %cst_53 : f32 to vector<8x32xf32>
    %139 = arith.mulf %138, %137 : vector<8x32xf32>
    %cst_54 = arith.constant 5.000000e-01 : f32
    %140 = vector.broadcast %cst_54 : f32 to vector<8x32xf32>
    %141 = arith.addf %139, %140 : vector<8x32xf32>
    %142 = vector.extract_strided_slice %136 {offsets = [0, 32], sizes = [8, 32], strides = [1, 1]} : vector<8x128xf32> to vector<8x32xf32>
    %cst_55 = arith.constant 5.000000e-01 : f32
    %143 = vector.broadcast %cst_55 : f32 to vector<8x32xf32>
    %144 = arith.mulf %143, %142 : vector<8x32xf32>
    %cst_56 = arith.constant 5.000000e-01 : f32
    %145 = vector.broadcast %cst_56 : f32 to vector<8x32xf32>
    %146 = arith.addf %144, %145 : vector<8x32xf32>
    %147 = vector.extract_strided_slice %136 {offsets = [0, 64], sizes = [8, 32], strides = [1, 1]} : vector<8x128xf32> to vector<8x32xf32>
    %cst_57 = arith.constant 5.000000e-01 : f32
    %148 = vector.broadcast %cst_57 : f32 to vector<8x32xf32>
    %149 = arith.mulf %148, %147 : vector<8x32xf32>
    %cst_58 = arith.constant 5.000000e-01 : f32
    %150 = vector.broadcast %cst_58 : f32 to vector<8x32xf32>
    %151 = arith.addf %149, %150 : vector<8x32xf32>
    %152 = vector.extract_strided_slice %136 {offsets = [0, 96], sizes = [8, 32], strides = [1, 1]} : vector<8x128xf32> to vector<8x32xf32>
    %153 = arith.mulf %146, %125 : vector<8x32xf32>
    %154 = arith.mulf %141, %152 : vector<8x32xf32>
    %155 = arith.addf %153, %154 : vector<8x32xf32>
    %156 = math.tanh %155 : vector<8x32xf32>
    %157 = arith.mulf %151, %156 : vector<8x32xf32>
    %158 = arith.index_cast %131 : i32 to index
    %c0_59 = arith.constant 0 : index
    %159 = vector.load %arg10[%158, %c0_59] : memref<64x32xf32, #tpu.memory_space<vmem>>, vector<8x32xf32>
    tpu.vector_store %arg10[%158, %c0_59], %157 {strides = array<i32>} : memref<64x32xf32, #tpu.memory_space<vmem>>, vector<8x32xf32>,
    %c5_i32 = arith.constant 5 : i32
    %c8_i32_60 = arith.constant 8 : i32
    %160 = arith.muli %c5_i32, %c8_i32_60 : i32
    %161 = tpu.assume_multiple %160, 8 : i32
    %162 = arith.index_cast %161 : i32 to index
    %c0_61 = arith.constant 0 : index
    %163 = vector.load %arg11[%162, %c0_61] : memref<64x128xf32, #tpu.memory_space<vmem>>, vector<8x128xf32>
    %cst_62 = arith.constant dense<0.000000e+00> : vector<8x128xf32>
    %164 = tpu.matmul %157, %0, %cst_62 {dimension_numbers = #tpu.dot_dimension_numbers<[1], [0], [0], [1], [0, 0, 1, 1], [], []>} : vector<8x32xf32>, vector<32x128xf32>, vector<8x128xf32> -> vector<8x128xf32>
    %165 = arith.addf %163, %164 : vector<8x128xf32>
    %166 = math.tanh %165 : vector<8x128xf32>
    %167 = vector.extract_strided_slice %166 {offsets = [0, 0], sizes = [8, 32], strides = [1, 1]} : vector<8x128xf32> to vector<8x32xf32>
    %cst_63 = arith.constant 5.000000e-01 : f32
    %168 = vector.broadcast %cst_63 : f32 to vector<8x32xf32>
    %169 = arith.mulf %168, %167 : vector<8x32xf32>
    %cst_64 = arith.constant 5.000000e-01 : f32
    %170 = vector.broadcast %cst_64 : f32 to vector<8x32xf32>
    %171 = arith.addf %169, %170 : vector<8x32xf32>
    %172 = vector.extract_strided_slice %166 {offsets = [0, 32], sizes = [8, 32], strides = [1, 1]} : vector<8x128xf32> to vector<8x32xf32>
    %cst_65 = arith.constant 5.000000e-01 : f32
    %173 = vector.broadcast %cst_65 : f32 to vector<8x32xf32>
    %174 = arith.mulf %173, %172 : vector<8x32xf32>
    %cst_66 = arith.constant 5.000000e-01 : f32
    %175 = vector.broadcast %cst_66 : f32 to vector<8x32xf32>
    %176 = arith.addf %174, %175 : vector<8x32xf32>
    %177 = vector.extract_strided_slice %166 {offsets = [0, 64], sizes = [8, 32], strides = [1, 1]} : vector<8x128xf32> to vector<8x32xf32>
    %cst_67 = arith.constant 5.000000e-01 : f32
    %178 = vector.broadcast %cst_67 : f32 to vector<8x32xf32>
    %179 = arith.mulf %178, %177 : vector<8x32xf32>
    %cst_68 = arith.constant 5.000000e-01 : f32
    %180 = vector.broadcast %cst_68 : f32 to vector<8x32xf32>
    %181 = arith.addf %179, %180 : vector<8x32xf32>
    %182 = vector.extract_strided_slice %166 {offsets = [0, 96], sizes = [8, 32], strides = [1, 1]} : vector<8x128xf32> to vector<8x32xf32>
    %183 = arith.mulf %176, %155 : vector<8x32xf32>
    %184 = arith.mulf %171, %182 : vector<8x32xf32>
    %185 = arith.addf %183, %184 : vector<8x32xf32>
    %186 = math.tanh %185 : vector<8x32xf32>
    %187 = arith.mulf %181, %186 : vector<8x32xf32>
    %188 = arith.index_cast %161 : i32 to index
    %c0_69 = arith.constant 0 : index
    %189 = vector.load %arg10[%188, %c0_69] : memref<64x32xf32, #tpu.memory_space<vmem>>, vector<8x32xf32>
    tpu.vector_store %arg10[%188, %c0_69], %187 {strides = array<i32>} : memref<64x32xf32, #tpu.memory_space<vmem>>, vector<8x32xf32>,
    %c6_i32 = arith.constant 6 : i32
    %c8_i32_70 = arith.constant 8 : i32
    %190 = arith.muli %c6_i32, %c8_i32_70 : i32
    %191 = tpu.assume_multiple %190, 8 : i32
    %192 = arith.index_cast %191 : i32 to index
    %c0_71 = arith.constant 0 : index
    %193 = vector.load %arg11[%192, %c0_71] : memref<64x128xf32, #tpu.memory_space<vmem>>, vector<8x128xf32>
    %cst_72 = arith.constant dense<0.000000e+00> : vector<8x128xf32>
    %194 = tpu.matmul %187, %0, %cst_72 {dimension_numbers = #tpu.dot_dimension_numbers<[1], [0], [0], [1], [0, 0, 1, 1], [], []>} : vector<8x32xf32>, vector<32x128xf32>, vector<8x128xf32> -> vector<8x128xf32>
    %195 = arith.addf %193, %194 : vector<8x128xf32>
    %196 = math.tanh %195 : vector<8x128xf32>
    %197 = vector.extract_strided_slice %196 {offsets = [0, 0], sizes = [8, 32], strides = [1, 1]} : vector<8x128xf32> to vector<8x32xf32>
    %cst_73 = arith.constant 5.000000e-01 : f32
    %198 = vector.broadcast %cst_73 : f32 to vector<8x32xf32>
    %199 = arith.mulf %198, %197 : vector<8x32xf32>
    %cst_74 = arith.constant 5.000000e-01 : f32
    %200 = vector.broadcast %cst_74 : f32 to vector<8x32xf32>
    %201 = arith.addf %199, %200 : vector<8x32xf32>
    %202 = vector.extract_strided_slice %196 {offsets = [0, 32], sizes = [8, 32], strides = [1, 1]} : vector<8x128xf32> to vector<8x32xf32>
    %cst_75 = arith.constant 5.000000e-01 : f32
    %203 = vector.broadcast %cst_75 : f32 to vector<8x32xf32>
    %204 = arith.mulf %203, %202 : vector<8x32xf32>
    %cst_76 = arith.constant 5.000000e-01 : f32
    %205 = vector.broadcast %cst_76 : f32 to vector<8x32xf32>
    %206 = arith.addf %204, %205 : vector<8x32xf32>
    %207 = vector.extract_strided_slice %196 {offsets = [0, 64], sizes = [8, 32], strides = [1, 1]} : vector<8x128xf32> to vector<8x32xf32>
    %cst_77 = arith.constant 5.000000e-01 : f32
    %208 = vector.broadcast %cst_77 : f32 to vector<8x32xf32>
    %209 = arith.mulf %208, %207 : vector<8x32xf32>
    %cst_78 = arith.constant 5.000000e-01 : f32
    %210 = vector.broadcast %cst_78 : f32 to vector<8x32xf32>
    %211 = arith.addf %209, %210 : vector<8x32xf32>
    %212 = vector.extract_strided_slice %196 {offsets = [0, 96], sizes = [8, 32], strides = [1, 1]} : vector<8x128xf32> to vector<8x32xf32>
    %213 = arith.mulf %206, %185 : vector<8x32xf32>
    %214 = arith.mulf %201, %212 : vector<8x32xf32>
    %215 = arith.addf %213, %214 : vector<8x32xf32>
    %216 = math.tanh %215 : vector<8x32xf32>
    %217 = arith.mulf %211, %216 : vector<8x32xf32>
    %218 = arith.index_cast %191 : i32 to index
    %c0_79 = arith.constant 0 : index
    %219 = vector.load %arg10[%218, %c0_79] : memref<64x32xf32, #tpu.memory_space<vmem>>, vector<8x32xf32>
    tpu.vector_store %arg10[%218, %c0_79], %217 {strides = array<i32>} : memref<64x32xf32, #tpu.memory_space<vmem>>, vector<8x32xf32>,
    %c7_i32 = arith.constant 7 : i32
    %c8_i32_80 = arith.constant 8 : i32
    %220 = arith.muli %c7_i32, %c8_i32_80 : i32
    %221 = tpu.assume_multiple %220, 8 : i32
    %222 = arith.index_cast %221 : i32 to index
    %c0_81 = arith.constant 0 : index
    %223 = vector.load %arg11[%222, %c0_81] : memref<64x128xf32, #tpu.memory_space<vmem>>, vector<8x128xf32>
    %cst_82 = arith.constant dense<0.000000e+00> : vector<8x128xf32>
    %224 = tpu.matmul %217, %0, %cst_82 {dimension_numbers = #tpu.dot_dimension_numbers<[1], [0], [0], [1], [0, 0, 1, 1], [], []>} : vector<8x32xf32>, vector<32x128xf32>, vector<8x128xf32> -> vector<8x128xf32>
    %225 = arith.addf %223, %224 : vector<8x128xf32>
    %226 = math.tanh %225 : vector<8x128xf32>
    %227 = vector.extract_strided_slice %226 {offsets = [0, 0], sizes = [8, 32], strides = [1, 1]} : vector<8x128xf32> to vector<8x32xf32>
    %cst_83 = arith.constant 5.000000e-01 : f32
    %228 = vector.broadcast %cst_83 : f32 to vector<8x32xf32>
    %229 = arith.mulf %228, %227 : vector<8x32xf32>
    %cst_84 = arith.constant 5.000000e-01 : f32
    %230 = vector.broadcast %cst_84 : f32 to vector<8x32xf32>
    %231 = arith.addf %229, %230 : vector<8x32xf32>
    %232 = vector.extract_strided_slice %226 {offsets = [0, 32], sizes = [8, 32], strides = [1, 1]} : vector<8x128xf32> to vector<8x32xf32>
    %cst_85 = arith.constant 5.000000e-01 : f32
    %233 = vector.broadcast %cst_85 : f32 to vector<8x32xf32>
    %234 = arith.mulf %233, %232 : vector<8x32xf32>
    %cst_86 = arith.constant 5.000000e-01 : f32
    %235 = vector.broadcast %cst_86 : f32 to vector<8x32xf32>
    %236 = arith.addf %234, %235 : vector<8x32xf32>
    %237 = vector.extract_strided_slice %226 {offsets = [0, 64], sizes = [8, 32], strides = [1, 1]} : vector<8x128xf32> to vector<8x32xf32>
    %cst_87 = arith.constant 5.000000e-01 : f32
    %238 = vector.broadcast %cst_87 : f32 to vector<8x32xf32>
    %239 = arith.mulf %238, %237 : vector<8x32xf32>
    %cst_88 = arith.constant 5.000000e-01 : f32
    %240 = vector.broadcast %cst_88 : f32 to vector<8x32xf32>
    %241 = arith.addf %239, %240 : vector<8x32xf32>
    %242 = vector.extract_strided_slice %226 {offsets = [0, 96], sizes = [8, 32], strides = [1, 1]} : vector<8x128xf32> to vector<8x32xf32>
    %243 = arith.mulf %236, %215 : vector<8x32xf32>
    %244 = arith.mulf %231, %242 : vector<8x32xf32>
    %245 = arith.addf %243, %244 : vector<8x32xf32>
    %246 = math.tanh %245 : vector<8x32xf32>
    %247 = arith.mulf %241, %246 : vector<8x32xf32>
    %248 = arith.index_cast %221 : i32 to index
    %c0_89 = arith.constant 0 : index
    %249 = vector.load %arg10[%248, %c0_89] : memref<64x32xf32, #tpu.memory_space<vmem>>, vector<8x32xf32>
    tpu.vector_store %arg10[%248, %c0_89], %247 {strides = array<i32>} : memref<64x32xf32, #tpu.memory_space<vmem>>, vector<8x32xf32>,
    %c8_i32_90 = arith.constant 8 : i32
    %c0_91 = arith.constant 0 : index
    %c0_92 = arith.constant 0 : index
    %250 = vector.load %arg6[%c0_91, %c0_92] : memref<32x128xf32, #tpu.memory_space<vmem>>, vector<32x128xf32>
    %c0_93 = arith.constant 0 : index
    %c0_94 = arith.constant 0 : index
    %251 = vector.load %arg10[%c0_93, %c0_94] : memref<64x32xf32, #tpu.memory_space<vmem>>, vector<64x32xf32>
    %c0_95 = arith.constant 0 : index
    %c0_96 = arith.constant 0 : index
    %252 = vector.load %arg5[%c0_95, %c0_96] : memref<32x128xf32, #tpu.memory_space<vmem>>, vector<32x128xf32>
    %cst_97 = arith.constant dense<0.000000e+00> : vector<64x128xf32>
    %253 = tpu.matmul %251, %252, %cst_97 {dimension_numbers = #tpu.dot_dimension_numbers<[1], [0], [0], [1], [0, 0, 1, 1], [], []>} : vector<64x32xf32>, vector<32x128xf32>, vector<64x128xf32> -> vector<64x128xf32>
    %c0_98 = arith.constant 0 : index
    %c0_99 = arith.constant 0 : index
    %254 = vector.load %arg7[%c0_98, %c0_99] : memref<1x128xf32, #tpu.memory_space<vmem>>, vector<1x128xf32>
    %255 = vector.broadcast %254 : vector<1x128xf32> to vector<64x128xf32>
    %256 = arith.addf %253, %255 : vector<64x128xf32>
    %c0_100 = arith.constant 0 : index
    %c0_101 = arith.constant 0 : index
    %257 = vector.load %arg11[%c0_100, %c0_101] : memref<64x128xf32, #tpu.memory_space<vmem>>, vector<64x128xf32>
    tpu.vector_store %arg11[%c0_100, %c0_101], %256 {strides = array<i32>} : memref<64x128xf32, #tpu.memory_space<vmem>>, vector<64x128xf32>,
    %cst_102 = arith.constant 0.000000e+00 : f32
    %258 = vector.broadcast %cst_102 : f32 to vector<8x32xf32>
    %cst_103 = arith.constant 0.000000e+00 : f32
    %259 = vector.broadcast %cst_103 : f32 to vector<8x32xf32>
    %c0_i32_104 = arith.constant 0 : i32
    %c8_i32_105 = arith.constant 8 : i32
    %260 = arith.muli %c0_i32_104, %c8_i32_105 : i32
    %261 = tpu.assume_multiple %260, 8 : i32
    %262 = arith.index_cast %261 : i32 to index
    %c0_106 = arith.constant 0 : index
    %263 = vector.load %arg11[%262, %c0_106] : memref<64x128xf32, #tpu.memory_space<vmem>>, vector<8x128xf32>
    %cst_107 = arith.constant dense<0.000000e+00> : vector<8x128xf32>
    %264 = tpu.matmul %258, %250, %cst_107 {dimension_numbers = #tpu.dot_dimension_numbers<[1], [0], [0], [1], [0, 0, 1, 1], [], []>} : vector<8x32xf32>, vector<32x128xf32>, vector<8x128xf32> -> vector<8x128xf32>
    %265 = arith.addf %263, %264 : vector<8x128xf32>
    %266 = math.tanh %265 : vector<8x128xf32>
    %267 = vector.extract_strided_slice %266 {offsets = [0, 0], sizes = [8, 32], strides = [1, 1]} : vector<8x128xf32> to vector<8x32xf32>
    %cst_108 = arith.constant 5.000000e-01 : f32
    %268 = vector.broadcast %cst_108 : f32 to vector<8x32xf32>
    %269 = arith.mulf %268, %267 : vector<8x32xf32>
    %cst_109 = arith.constant 5.000000e-01 : f32
    %270 = vector.broadcast %cst_109 : f32 to vector<8x32xf32>
    %271 = arith.addf %269, %270 : vector<8x32xf32>
    %272 = vector.extract_strided_slice %266 {offsets = [0, 32], sizes = [8, 32], strides = [1, 1]} : vector<8x128xf32> to vector<8x32xf32>
    %cst_110 = arith.constant 5.000000e-01 : f32
    %273 = vector.broadcast %cst_110 : f32 to vector<8x32xf32>
    %274 = arith.mulf %273, %272 : vector<8x32xf32>
    %cst_111 = arith.constant 5.000000e-01 : f32
    %275 = vector.broadcast %cst_111 : f32 to vector<8x32xf32>
    %276 = arith.addf %274, %275 : vector<8x32xf32>
    %277 = vector.extract_strided_slice %266 {offsets = [0, 64], sizes = [8, 32], strides = [1, 1]} : vector<8x128xf32> to vector<8x32xf32>
    %cst_112 = arith.constant 5.000000e-01 : f32
    %278 = vector.broadcast %cst_112 : f32 to vector<8x32xf32>
    %279 = arith.mulf %278, %277 : vector<8x32xf32>
    %cst_113 = arith.constant 5.000000e-01 : f32
    %280 = vector.broadcast %cst_113 : f32 to vector<8x32xf32>
    %281 = arith.addf %279, %280 : vector<8x32xf32>
    %282 = vector.extract_strided_slice %266 {offsets = [0, 96], sizes = [8, 32], strides = [1, 1]} : vector<8x128xf32> to vector<8x32xf32>
    %283 = arith.mulf %276, %259 : vector<8x32xf32>
    %284 = arith.mulf %271, %282 : vector<8x32xf32>
    %285 = arith.addf %283, %284 : vector<8x32xf32>
    %286 = math.tanh %285 : vector<8x32xf32>
    %287 = arith.mulf %281, %286 : vector<8x32xf32>
    %c1_i32_114 = arith.constant 1 : i32
    %c8_i32_115 = arith.constant 8 : i32
    %288 = arith.muli %c1_i32_114, %c8_i32_115 : i32
    %289 = tpu.assume_multiple %288, 8 : i32
    %290 = arith.index_cast %289 : i32 to index
    %c0_116 = arith.constant 0 : index
    %291 = vector.load %arg11[%290, %c0_116] : memref<64x128xf32, #tpu.memory_space<vmem>>, vector<8x128xf32>
    %cst_117 = arith.constant dense<0.000000e+00> : vector<8x128xf32>
    %292 = tpu.matmul %287, %250, %cst_117 {dimension_numbers = #tpu.dot_dimension_numbers<[1], [0], [0], [1], [0, 0, 1, 1], [], []>} : vector<8x32xf32>, vector<32x128xf32>, vector<8x128xf32> -> vector<8x128xf32>
    %293 = arith.addf %291, %292 : vector<8x128xf32>
    %294 = math.tanh %293 : vector<8x128xf32>
    %295 = vector.extract_strided_slice %294 {offsets = [0, 0], sizes = [8, 32], strides = [1, 1]} : vector<8x128xf32> to vector<8x32xf32>
    %cst_118 = arith.constant 5.000000e-01 : f32
    %296 = vector.broadcast %cst_118 : f32 to vector<8x32xf32>
    %297 = arith.mulf %296, %295 : vector<8x32xf32>
    %cst_119 = arith.constant 5.000000e-01 : f32
    %298 = vector.broadcast %cst_119 : f32 to vector<8x32xf32>
    %299 = arith.addf %297, %298 : vector<8x32xf32>
    %300 = vector.extract_strided_slice %294 {offsets = [0, 32], sizes = [8, 32], strides = [1, 1]} : vector<8x128xf32> to vector<8x32xf32>
    %cst_120 = arith.constant 5.000000e-01 : f32
    %301 = vector.broadcast %cst_120 : f32 to vector<8x32xf32>
    %302 = arith.mulf %301, %300 : vector<8x32xf32>
    %cst_121 = arith.constant 5.000000e-01 : f32
    %303 = vector.broadcast %cst_121 : f32 to vector<8x32xf32>
    %304 = arith.addf %302, %303 : vector<8x32xf32>
    %305 = vector.extract_strided_slice %294 {offsets = [0, 64], sizes = [8, 32], strides = [1, 1]} : vector<8x128xf32> to vector<8x32xf32>
    %cst_122 = arith.constant 5.000000e-01 : f32
    %306 = vector.broadcast %cst_122 : f32 to vector<8x32xf32>
    %307 = arith.mulf %306, %305 : vector<8x32xf32>
    %cst_123 = arith.constant 5.000000e-01 : f32
    %308 = vector.broadcast %cst_123 : f32 to vector<8x32xf32>
    %309 = arith.addf %307, %308 : vector<8x32xf32>
    %310 = vector.extract_strided_slice %294 {offsets = [0, 96], sizes = [8, 32], strides = [1, 1]} : vector<8x128xf32> to vector<8x32xf32>
    %311 = arith.mulf %304, %285 : vector<8x32xf32>
    %312 = arith.mulf %299, %310 : vector<8x32xf32>
    %313 = arith.addf %311, %312 : vector<8x32xf32>
    %314 = math.tanh %313 : vector<8x32xf32>
    %315 = arith.mulf %309, %314 : vector<8x32xf32>
    %c2_i32_124 = arith.constant 2 : i32
    %c8_i32_125 = arith.constant 8 : i32
    %316 = arith.muli %c2_i32_124, %c8_i32_125 : i32
    %317 = tpu.assume_multiple %316, 8 : i32
    %318 = arith.index_cast %317 : i32 to index
    %c0_126 = arith.constant 0 : index
    %319 = vector.load %arg11[%318, %c0_126] : memref<64x128xf32, #tpu.memory_space<vmem>>, vector<8x128xf32>
    %cst_127 = arith.constant dense<0.000000e+00> : vector<8x128xf32>
    %320 = tpu.matmul %315, %250, %cst_127 {dimension_numbers = #tpu.dot_dimension_numbers<[1], [0], [0], [1], [0, 0, 1, 1], [], []>} : vector<8x32xf32>, vector<32x128xf32>, vector<8x128xf32> -> vector<8x128xf32>
    %321 = arith.addf %319, %320 : vector<8x128xf32>
    %322 = math.tanh %321 : vector<8x128xf32>
    %323 = vector.extract_strided_slice %322 {offsets = [0, 0], sizes = [8, 32], strides = [1, 1]} : vector<8x128xf32> to vector<8x32xf32>
    %cst_128 = arith.constant 5.000000e-01 : f32
    %324 = vector.broadcast %cst_128 : f32 to vector<8x32xf32>
    %325 = arith.mulf %324, %323 : vector<8x32xf32>
    %cst_129 = arith.constant 5.000000e-01 : f32
    %326 = vector.broadcast %cst_129 : f32 to vector<8x32xf32>
    %327 = arith.addf %325, %326 : vector<8x32xf32>
    %328 = vector.extract_strided_slice %322 {offsets = [0, 32], sizes = [8, 32], strides = [1, 1]} : vector<8x128xf32> to vector<8x32xf32>
    %cst_130 = arith.constant 5.000000e-01 : f32
    %329 = vector.broadcast %cst_130 : f32 to vector<8x32xf32>
    %330 = arith.mulf %329, %328 : vector<8x32xf32>
    %cst_131 = arith.constant 5.000000e-01 : f32
    %331 = vector.broadcast %cst_131 : f32 to vector<8x32xf32>
    %332 = arith.addf %330, %331 : vector<8x32xf32>
    %333 = vector.extract_strided_slice %322 {offsets = [0, 64], sizes = [8, 32], strides = [1, 1]} : vector<8x128xf32> to vector<8x32xf32>
    %cst_132 = arith.constant 5.000000e-01 : f32
    %334 = vector.broadcast %cst_132 : f32 to vector<8x32xf32>
    %335 = arith.mulf %334, %333 : vector<8x32xf32>
    %cst_133 = arith.constant 5.000000e-01 : f32
    %336 = vector.broadcast %cst_133 : f32 to vector<8x32xf32>
    %337 = arith.addf %335, %336 : vector<8x32xf32>
    %338 = vector.extract_strided_slice %322 {offsets = [0, 96], sizes = [8, 32], strides = [1, 1]} : vector<8x128xf32> to vector<8x32xf32>
    %339 = arith.mulf %332, %313 : vector<8x32xf32>
    %340 = arith.mulf %327, %338 : vector<8x32xf32>
    %341 = arith.addf %339, %340 : vector<8x32xf32>
    %342 = math.tanh %341 : vector<8x32xf32>
    %343 = arith.mulf %337, %342 : vector<8x32xf32>
    %c3_i32_134 = arith.constant 3 : i32
    %c8_i32_135 = arith.constant 8 : i32
    %344 = arith.muli %c3_i32_134, %c8_i32_135 : i32
    %345 = tpu.assume_multiple %344, 8 : i32
    %346 = arith.index_cast %345 : i32 to index
    %c0_136 = arith.constant 0 : index
    %347 = vector.load %arg11[%346, %c0_136] : memref<64x128xf32, #tpu.memory_space<vmem>>, vector<8x128xf32>
    %cst_137 = arith.constant dense<0.000000e+00> : vector<8x128xf32>
    %348 = tpu.matmul %343, %250, %cst_137 {dimension_numbers = #tpu.dot_dimension_numbers<[1], [0], [0], [1], [0, 0, 1, 1], [], []>} : vector<8x32xf32>, vector<32x128xf32>, vector<8x128xf32> -> vector<8x128xf32>
    %349 = arith.addf %347, %348 : vector<8x128xf32>
    %350 = math.tanh %349 : vector<8x128xf32>
    %351 = vector.extract_strided_slice %350 {offsets = [0, 0], sizes = [8, 32], strides = [1, 1]} : vector<8x128xf32> to vector<8x32xf32>
    %cst_138 = arith.constant 5.000000e-01 : f32
    %352 = vector.broadcast %cst_138 : f32 to vector<8x32xf32>
    %353 = arith.mulf %352, %351 : vector<8x32xf32>
    %cst_139 = arith.constant 5.000000e-01 : f32
    %354 = vector.broadcast %cst_139 : f32 to vector<8x32xf32>
    %355 = arith.addf %353, %354 : vector<8x32xf32>
    %356 = vector.extract_strided_slice %350 {offsets = [0, 32], sizes = [8, 32], strides = [1, 1]} : vector<8x128xf32> to vector<8x32xf32>
    %cst_140 = arith.constant 5.000000e-01 : f32
    %357 = vector.broadcast %cst_140 : f32 to vector<8x32xf32>
    %358 = arith.mulf %357, %356 : vector<8x32xf32>
    %cst_141 = arith.constant 5.000000e-01 : f32
    %359 = vector.broadcast %cst_141 : f32 to vector<8x32xf32>
    %360 = arith.addf %358, %359 : vector<8x32xf32>
    %361 = vector.extract_strided_slice %350 {offsets = [0, 64], sizes = [8, 32], strides = [1, 1]} : vector<8x128xf32> to vector<8x32xf32>
    %cst_142 = arith.constant 5.000000e-01 : f32
    %362 = vector.broadcast %cst_142 : f32 to vector<8x32xf32>
    %363 = arith.mulf %362, %361 : vector<8x32xf32>
    %cst_143 = arith.constant 5.000000e-01 : f32
    %364 = vector.broadcast %cst_143 : f32 to vector<8x32xf32>
    %365 = arith.addf %363, %364 : vector<8x32xf32>
    %366 = vector.extract_strided_slice %350 {offsets = [0, 96], sizes = [8, 32], strides = [1, 1]} : vector<8x128xf32> to vector<8x32xf32>
    %367 = arith.mulf %360, %341 : vector<8x32xf32>
    %368 = arith.mulf %355, %366 : vector<8x32xf32>
    %369 = arith.addf %367, %368 : vector<8x32xf32>
    %370 = math.tanh %369 : vector<8x32xf32>
    %371 = arith.mulf %365, %370 : vector<8x32xf32>
    %c4_i32_144 = arith.constant 4 : i32
    %c8_i32_145 = arith.constant 8 : i32
    %372 = arith.muli %c4_i32_144, %c8_i32_145 : i32
    %373 = tpu.assume_multiple %372, 8 : i32
    %374 = arith.index_cast %373 : i32 to index
    %c0_146 = arith.constant 0 : index
    %375 = vector.load %arg11[%374, %c0_146] : memref<64x128xf32, #tpu.memory_space<vmem>>, vector<8x128xf32>
    %cst_147 = arith.constant dense<0.000000e+00> : vector<8x128xf32>
    %376 = tpu.matmul %371, %250, %cst_147 {dimension_numbers = #tpu.dot_dimension_numbers<[1], [0], [0], [1], [0, 0, 1, 1], [], []>} : vector<8x32xf32>, vector<32x128xf32>, vector<8x128xf32> -> vector<8x128xf32>
    %377 = arith.addf %375, %376 : vector<8x128xf32>
    %378 = math.tanh %377 : vector<8x128xf32>
    %379 = vector.extract_strided_slice %378 {offsets = [0, 0], sizes = [8, 32], strides = [1, 1]} : vector<8x128xf32> to vector<8x32xf32>
    %cst_148 = arith.constant 5.000000e-01 : f32
    %380 = vector.broadcast %cst_148 : f32 to vector<8x32xf32>
    %381 = arith.mulf %380, %379 : vector<8x32xf32>
    %cst_149 = arith.constant 5.000000e-01 : f32
    %382 = vector.broadcast %cst_149 : f32 to vector<8x32xf32>
    %383 = arith.addf %381, %382 : vector<8x32xf32>
    %384 = vector.extract_strided_slice %378 {offsets = [0, 32], sizes = [8, 32], strides = [1, 1]} : vector<8x128xf32> to vector<8x32xf32>
    %cst_150 = arith.constant 5.000000e-01 : f32
    %385 = vector.broadcast %cst_150 : f32 to vector<8x32xf32>
    %386 = arith.mulf %385, %384 : vector<8x32xf32>
    %cst_151 = arith.constant 5.000000e-01 : f32
    %387 = vector.broadcast %cst_151 : f32 to vector<8x32xf32>
    %388 = arith.addf %386, %387 : vector<8x32xf32>
    %389 = vector.extract_strided_slice %378 {offsets = [0, 64], sizes = [8, 32], strides = [1, 1]} : vector<8x128xf32> to vector<8x32xf32>
    %cst_152 = arith.constant 5.000000e-01 : f32
    %390 = vector.broadcast %cst_152 : f32 to vector<8x32xf32>
    %391 = arith.mulf %390, %389 : vector<8x32xf32>
    %cst_153 = arith.constant 5.000000e-01 : f32
    %392 = vector.broadcast %cst_153 : f32 to vector<8x32xf32>
    %393 = arith.addf %391, %392 : vector<8x32xf32>
    %394 = vector.extract_strided_slice %378 {offsets = [0, 96], sizes = [8, 32], strides = [1, 1]} : vector<8x128xf32> to vector<8x32xf32>
    %395 = arith.mulf %388, %369 : vector<8x32xf32>
    %396 = arith.mulf %383, %394 : vector<8x32xf32>
    %397 = arith.addf %395, %396 : vector<8x32xf32>
    %398 = math.tanh %397 : vector<8x32xf32>
    %399 = arith.mulf %393, %398 : vector<8x32xf32>
    %c5_i32_154 = arith.constant 5 : i32
    %c8_i32_155 = arith.constant 8 : i32
    %400 = arith.muli %c5_i32_154, %c8_i32_155 : i32
    %401 = tpu.assume_multiple %400, 8 : i32
    %402 = arith.index_cast %401 : i32 to index
    %c0_156 = arith.constant 0 : index
    %403 = vector.load %arg11[%402, %c0_156] : memref<64x128xf32, #tpu.memory_space<vmem>>, vector<8x128xf32>
    %cst_157 = arith.constant dense<0.000000e+00> : vector<8x128xf32>
    %404 = tpu.matmul %399, %250, %cst_157 {dimension_numbers = #tpu.dot_dimension_numbers<[1], [0], [0], [1], [0, 0, 1, 1], [], []>} : vector<8x32xf32>, vector<32x128xf32>, vector<8x128xf32> -> vector<8x128xf32>
    %405 = arith.addf %403, %404 : vector<8x128xf32>
    %406 = math.tanh %405 : vector<8x128xf32>
    %407 = vector.extract_strided_slice %406 {offsets = [0, 0], sizes = [8, 32], strides = [1, 1]} : vector<8x128xf32> to vector<8x32xf32>
    %cst_158 = arith.constant 5.000000e-01 : f32
    %408 = vector.broadcast %cst_158 : f32 to vector<8x32xf32>
    %409 = arith.mulf %408, %407 : vector<8x32xf32>
    %cst_159 = arith.constant 5.000000e-01 : f32
    %410 = vector.broadcast %cst_159 : f32 to vector<8x32xf32>
    %411 = arith.addf %409, %410 : vector<8x32xf32>
    %412 = vector.extract_strided_slice %406 {offsets = [0, 32], sizes = [8, 32], strides = [1, 1]} : vector<8x128xf32> to vector<8x32xf32>
    %cst_160 = arith.constant 5.000000e-01 : f32
    %413 = vector.broadcast %cst_160 : f32 to vector<8x32xf32>
    %414 = arith.mulf %413, %412 : vector<8x32xf32>
    %cst_161 = arith.constant 5.000000e-01 : f32
    %415 = vector.broadcast %cst_161 : f32 to vector<8x32xf32>
    %416 = arith.addf %414, %415 : vector<8x32xf32>
    %417 = vector.extract_strided_slice %406 {offsets = [0, 64], sizes = [8, 32], strides = [1, 1]} : vector<8x128xf32> to vector<8x32xf32>
    %cst_162 = arith.constant 5.000000e-01 : f32
    %418 = vector.broadcast %cst_162 : f32 to vector<8x32xf32>
    %419 = arith.mulf %418, %417 : vector<8x32xf32>
    %cst_163 = arith.constant 5.000000e-01 : f32
    %420 = vector.broadcast %cst_163 : f32 to vector<8x32xf32>
    %421 = arith.addf %419, %420 : vector<8x32xf32>
    %422 = vector.extract_strided_slice %406 {offsets = [0, 96], sizes = [8, 32], strides = [1, 1]} : vector<8x128xf32> to vector<8x32xf32>
    %423 = arith.mulf %416, %397 : vector<8x32xf32>
    %424 = arith.mulf %411, %422 : vector<8x32xf32>
    %425 = arith.addf %423, %424 : vector<8x32xf32>
    %426 = math.tanh %425 : vector<8x32xf32>
    %427 = arith.mulf %421, %426 : vector<8x32xf32>
    %c6_i32_164 = arith.constant 6 : i32
    %c8_i32_165 = arith.constant 8 : i32
    %428 = arith.muli %c6_i32_164, %c8_i32_165 : i32
    %429 = tpu.assume_multiple %428, 8 : i32
    %430 = arith.index_cast %429 : i32 to index
    %c0_166 = arith.constant 0 : index
    %431 = vector.load %arg11[%430, %c0_166] : memref<64x128xf32, #tpu.memory_space<vmem>>, vector<8x128xf32>
    %cst_167 = arith.constant dense<0.000000e+00> : vector<8x128xf32>
    %432 = tpu.matmul %427, %250, %cst_167 {dimension_numbers = #tpu.dot_dimension_numbers<[1], [0], [0], [1], [0, 0, 1, 1], [], []>} : vector<8x32xf32>, vector<32x128xf32>, vector<8x128xf32> -> vector<8x128xf32>
    %433 = arith.addf %431, %432 : vector<8x128xf32>
    %434 = math.tanh %433 : vector<8x128xf32>
    %435 = vector.extract_strided_slice %434 {offsets = [0, 0], sizes = [8, 32], strides = [1, 1]} : vector<8x128xf32> to vector<8x32xf32>
    %cst_168 = arith.constant 5.000000e-01 : f32
    %436 = vector.broadcast %cst_168 : f32 to vector<8x32xf32>
    %437 = arith.mulf %436, %435 : vector<8x32xf32>
    %cst_169 = arith.constant 5.000000e-01 : f32
    %438 = vector.broadcast %cst_169 : f32 to vector<8x32xf32>
    %439 = arith.addf %437, %438 : vector<8x32xf32>
    %440 = vector.extract_strided_slice %434 {offsets = [0, 32], sizes = [8, 32], strides = [1, 1]} : vector<8x128xf32> to vector<8x32xf32>
    %cst_170 = arith.constant 5.000000e-01 : f32
    %441 = vector.broadcast %cst_170 : f32 to vector<8x32xf32>
    %442 = arith.mulf %441, %440 : vector<8x32xf32>
    %cst_171 = arith.constant 5.000000e-01 : f32
    %443 = vector.broadcast %cst_171 : f32 to vector<8x32xf32>
    %444 = arith.addf %442, %443 : vector<8x32xf32>
    %445 = vector.extract_strided_slice %434 {offsets = [0, 64], sizes = [8, 32], strides = [1, 1]} : vector<8x128xf32> to vector<8x32xf32>
    %cst_172 = arith.constant 5.000000e-01 : f32
    %446 = vector.broadcast %cst_172 : f32 to vector<8x32xf32>
    %447 = arith.mulf %446, %445 : vector<8x32xf32>
    %cst_173 = arith.constant 5.000000e-01 : f32
    %448 = vector.broadcast %cst_173 : f32 to vector<8x32xf32>
    %449 = arith.addf %447, %448 : vector<8x32xf32>
    %450 = vector.extract_strided_slice %434 {offsets = [0, 96], sizes = [8, 32], strides = [1, 1]} : vector<8x128xf32> to vector<8x32xf32>
    %451 = arith.mulf %444, %425 : vector<8x32xf32>
    %452 = arith.mulf %439, %450 : vector<8x32xf32>
    %453 = arith.addf %451, %452 : vector<8x32xf32>
    %454 = math.tanh %453 : vector<8x32xf32>
    %455 = arith.mulf %449, %454 : vector<8x32xf32>
    %c7_i32_174 = arith.constant 7 : i32
    %c8_i32_175 = arith.constant 8 : i32
    %456 = arith.muli %c7_i32_174, %c8_i32_175 : i32
    %457 = tpu.assume_multiple %456, 8 : i32
    %458 = arith.index_cast %457 : i32 to index
    %c0_176 = arith.constant 0 : index
    %459 = vector.load %arg11[%458, %c0_176] : memref<64x128xf32, #tpu.memory_space<vmem>>, vector<8x128xf32>
    %cst_177 = arith.constant dense<0.000000e+00> : vector<8x128xf32>
    %460 = tpu.matmul %455, %250, %cst_177 {dimension_numbers = #tpu.dot_dimension_numbers<[1], [0], [0], [1], [0, 0, 1, 1], [], []>} : vector<8x32xf32>, vector<32x128xf32>, vector<8x128xf32> -> vector<8x128xf32>
    %461 = arith.addf %459, %460 : vector<8x128xf32>
    %462 = math.tanh %461 : vector<8x128xf32>
    %463 = vector.extract_strided_slice %462 {offsets = [0, 0], sizes = [8, 32], strides = [1, 1]} : vector<8x128xf32> to vector<8x32xf32>
    %cst_178 = arith.constant 5.000000e-01 : f32
    %464 = vector.broadcast %cst_178 : f32 to vector<8x32xf32>
    %465 = arith.mulf %464, %463 : vector<8x32xf32>
    %cst_179 = arith.constant 5.000000e-01 : f32
    %466 = vector.broadcast %cst_179 : f32 to vector<8x32xf32>
    %467 = arith.addf %465, %466 : vector<8x32xf32>
    %468 = vector.extract_strided_slice %462 {offsets = [0, 32], sizes = [8, 32], strides = [1, 1]} : vector<8x128xf32> to vector<8x32xf32>
    %cst_180 = arith.constant 5.000000e-01 : f32
    %469 = vector.broadcast %cst_180 : f32 to vector<8x32xf32>
    %470 = arith.mulf %469, %468 : vector<8x32xf32>
    %cst_181 = arith.constant 5.000000e-01 : f32
    %471 = vector.broadcast %cst_181 : f32 to vector<8x32xf32>
    %472 = arith.addf %470, %471 : vector<8x32xf32>
    %473 = vector.extract_strided_slice %462 {offsets = [0, 64], sizes = [8, 32], strides = [1, 1]} : vector<8x128xf32> to vector<8x32xf32>
    %cst_182 = arith.constant 5.000000e-01 : f32
    %474 = vector.broadcast %cst_182 : f32 to vector<8x32xf32>
    %475 = arith.mulf %474, %473 : vector<8x32xf32>
    %cst_183 = arith.constant 5.000000e-01 : f32
    %476 = vector.broadcast %cst_183 : f32 to vector<8x32xf32>
    %477 = arith.addf %475, %476 : vector<8x32xf32>
    %478 = vector.extract_strided_slice %462 {offsets = [0, 96], sizes = [8, 32], strides = [1, 1]} : vector<8x128xf32> to vector<8x32xf32>
    %479 = arith.mulf %472, %453 : vector<8x32xf32>
    %480 = arith.mulf %467, %478 : vector<8x32xf32>
    %481 = arith.addf %479, %480 : vector<8x32xf32>
    %482 = math.tanh %481 : vector<8x32xf32>
    %483 = arith.mulf %477, %482 : vector<8x32xf32>
    %c8_i32_184 = arith.constant 8 : i32
    %c0_185 = arith.constant 0 : index
    %c0_186 = arith.constant 0 : index
    %484 = vector.load %arg8[%c0_185, %c0_186] : memref<1x32xf32, #tpu.memory_space<vmem>>, vector<1x32xf32>
    %485 = vector.broadcast %484 : vector<1x32xf32> to vector<8x32xf32>
    %486 = arith.mulf %483, %485 : vector<8x32xf32>
    %cst_187 = arith.constant dense<0.000000e+00> : vector<8xf32>
    %487 = vector.multi_reduction <add>, %486, %cst_187 [1] : vector<8x32xf32> to vector<8xf32>
    %488 = vector.shape_cast %487 : vector<8xf32> to vector<8x1xf32>
    %c0_188 = arith.constant 0 : index
    %c0_189 = arith.constant 0 : index
    %489 = vector.load %arg9[%c0_188, %c0_189] : memref<8x1xf32, #tpu.memory_space<vmem>>, vector<8x1xf32>
    tpu.vector_store %arg9[%c0_188, %c0_189], %488 {strides = array<i32>} : memref<8x1xf32, #tpu.memory_space<vmem>>, vector<8x1xf32>,
    return
  }
  func.func @transform_0(%arg0: i32) -> (i32, i32) {
    %c0_i32 = arith.constant 0 : i32
    %c0_i32_0 = arith.constant 0 : i32
    %c0_i32_1 = arith.constant 0 : i32
    return %c0_i32, %c0_i32_0 : i32, i32
  }
  func.func @transform_1(%arg0: i32) -> (i32, i32) {
    %c0_i32 = arith.constant 0 : i32
    %c0_i32_0 = arith.constant 0 : i32
    %c0_i32_1 = arith.constant 0 : i32
    return %c0_i32, %c0_i32_0 : i32, i32
  }
  func.func @transform_2(%arg0: i32) -> (i32, i32) {
    %c0_i32 = arith.constant 0 : i32
    %c0_i32_0 = arith.constant 0 : i32
    %c0_i32_1 = arith.constant 0 : i32
    return %c0_i32, %c0_i32_0 : i32, i32
  }
  func.func @transform_3(%arg0: i32) -> (i32, i32) {
    %c0_i32 = arith.constant 0 : i32
    %c0_i32_0 = arith.constant 0 : i32
    %c0_i32_1 = arith.constant 0 : i32
    return %c0_i32, %c0_i32_0 : i32, i32
  }
  func.func @transform_4(%arg0: i32) -> (i32, i32) {
    %c0_i32 = arith.constant 0 : i32
    %c0_i32_0 = arith.constant 0 : i32
    %c0_i32_1 = arith.constant 0 : i32
    return %c0_i32, %c0_i32_0 : i32, i32
  }
  func.func @transform_5(%arg0: i32) -> (i32, i32) {
    %c0_i32 = arith.constant 0 : i32
    %c0_i32_0 = arith.constant 0 : i32
    %c0_i32_1 = arith.constant 0 : i32
    return %c0_i32, %c0_i32_0 : i32, i32
  }
  func.func @transform_6(%arg0: i32) -> (i32, i32) {
    %c0_i32 = arith.constant 0 : i32
    %c0_i32_0 = arith.constant 0 : i32
    %c0_i32_1 = arith.constant 0 : i32
    return %c0_i32, %c0_i32_0 : i32, i32
  }
  func.func @transform_7(%arg0: i32) -> (i32, i32) {
    %c0_i32 = arith.constant 0 : i32
    %c0_i32_0 = arith.constant 0 : i32
    %c0_i32_1 = arith.constant 0 : i32
    return %c0_i32, %c0_i32_0 : i32, i32
  }
  func.func @transform_8(%arg0: i32) -> (i32, i32) {
    %c0_i32 = arith.constant 0 : i32
    %c0_i32_0 = arith.constant 0 : i32
    %c0_i32_1 = arith.constant 0 : i32
    return %c0_i32, %c0_i32_0 : i32, i32
  }
}

</mosaic_0001>

<llo_original>
// kernel: tpu_custom_call.1
$region0: #{tpu_custom_call.1}
  #allocation0 [shape = 'u32[]', space=smem, size = 0x4, offset = 0x4, fixed_abs, tag = 'smem constant byte address 0x4 - core index']
  #allocation1 [shape = 'u32[144,128]{1,0:T(1,128)}', space=vmem, size = 0x12000, scoped, tag = 'internal scratch']
  #allocation2 [shape = 'f32[64,32]{1,0:T(8,128)}', space=vmem, size = 0x8000, scoped, tag = 'scratch operand']
  #allocation3 [shape = 'f32[64,128]{1,0:T(8,128)}', space=vmem, size = 0x8000, scoped, tag = 'scratch operand']
  %s0 = inlined_call_operand.vmem [shape: f32[64,4], index: 0, kind: input, shape index: {}]
  %s1 = inlined_call_operand.vmem [shape: f32[4,128], index: 1, kind: input, shape index: {}]
  %s2 = inlined_call_operand.vmem [shape: f32[32,128], index: 2, kind: input, shape index: {}]
  %s3 = inlined_call_operand.vmem [shape: f32[1,128], index: 3, kind: input, shape index: {}]
  %s4 = inlined_call_operand.vmem [shape: f32[32,128], index: 4, kind: input, shape index: {}]
  %s5 = inlined_call_operand.hbm [shape: f32[32,128], index: 5, kind: input, shape index: {}]
  %s6 = inlined_call_operand.vmem [shape: f32[1,128], index: 6, kind: input, shape index: {}]
  %s7 = inlined_call_operand.vmem [shape: f32[1,32], index: 7, kind: input, shape index: {}]
  %s8 = inlined_call_operand.vmem [shape: f32[8,1], index: 8, kind: output, shape index: {}]
  %s9 = sld [smem:[#allocation0]]
  $region46: #{tpu_custom_call.1} parent=0
    _
  %s11 = ssub.s32 1, %s9
  %s12 = scalar_select 0, %s11, %s9
  $region1: #{tpu_custom_call.1} parent=0
    #allocation4 [shape = 'u8[16384]{0}', space=vmem, size = 0x4000, scoped, tag = 'input window, operand 5, single buffered']
    #allocation5 [shape = 's32[1]{0}', space=sflag, size = 0x4, scoped, tag = 'scoped memory for tpu_custom_call.1']
    %13 = vsyncpa [#allocation5], 0
    // Predicated region
    $region2: #{tpu_custom_call.1} parent=1 // pred_check
      _
    $region3: #{tpu_custom_call.1} parent=1 // pred_check_branch
      %15 = sbr.rel (0) target = $region5
    $region4: #{tpu_custom_call.1} parent=1 // pred_region
      _
    $region5: #{tpu_custom_call.1} parent=1 // pred_fallthru
      _
    // Predicated region
    $region6: #{tpu_custom_call.1} parent=1 // pred_check
      _
    $region7: #{tpu_custom_call.1} parent=1 // pred_check_branch
      %17 = sbr.rel (0) target = $region9
    $region8: #{tpu_custom_call.1} parent=1 // pred_region
      _
    $region9: #{tpu_custom_call.1} parent=1 // pred_fallthru
      _
    // Predicated region
    $region10: #{tpu_custom_call.1} parent=1 // pred_check
      _
    $region11: #{tpu_custom_call.1} parent=1 // pred_check_branch
      %19 = sbr.rel (0) target = $region13
    $region12: #{tpu_custom_call.1} parent=1 // pred_region
      _
    $region13: #{tpu_custom_call.1} parent=1 // pred_fallthru
      _
    // Predicated region
    $region14: #{tpu_custom_call.1} parent=1 // pred_check
      _
    $region15: #{tpu_custom_call.1} parent=1 // pred_check_branch
      %21 = sbr.rel (0) target = $region17
    $region16: #{tpu_custom_call.1} parent=1 // pred_region
      _
    $region17: #{tpu_custom_call.1} parent=1 // pred_fallthru
      _
    // Predicated region
    $region18: #{tpu_custom_call.1} parent=1 // pred_check
      _
    $region19: #{tpu_custom_call.1} parent=1 // pred_check_branch
      %23 = sbr.rel (0) target = $region21
    $region20: #{tpu_custom_call.1} parent=1 // pred_region
      _
    $region21: #{tpu_custom_call.1} parent=1 // pred_fallthru
      _
    // Predicated region
    $region22: #{tpu_custom_call.1} parent=1 // pred_check
      _
    $region23: #{tpu_custom_call.1} parent=1 // pred_check_branch
      %25 = sbr.rel (0) target = $region25
    $region24: #{tpu_custom_call.1} parent=1 // pred_region
      %s27 = ssub.s32 512, 512
      %28 = vsyncadd [#allocation5], %s27
      %s29 = sshll.u32 [#allocation4], 4
      %s30 = int_to_ptr.vmem [resolvable:$true] %s29
      %35 = dma.hbm_to_vmem [thread:$0]  %s5, 512, %s30, [#allocation5], 128, 128, 8
    $region25: #{tpu_custom_call.1} parent=1 // pred_fallthru
      _
    // Predicated region
    $region26: #{tpu_custom_call.1} parent=1 // pred_check
      _
    $region27: #{tpu_custom_call.1} parent=1 // pred_check_branch
      %37 = sbr.rel (0) target = $region29
    $region28: #{tpu_custom_call.1} parent=1 // pred_region
      _
    $region29: #{tpu_custom_call.1} parent=1 // pred_fallthru
      _
    // Predicated region
    $region30: #{tpu_custom_call.1} parent=1 // pred_check
      _
    $region31: #{tpu_custom_call.1} parent=1 // pred_check_branch
      %39 = sbr.rel (0) target = $region33
    $region32: #{tpu_custom_call.1} parent=1 // pred_region
      _
    $region33: #{tpu_custom_call.1} parent=1 // pred_fallthru
      _
    // Predicated region
    $region34: #{tpu_custom_call.1} parent=1 // pred_check
      _
    $region35: #{tpu_custom_call.1} parent=1 // pred_check_branch
      %41 = sbr.rel (0) target = $region37
    $region36: #{tpu_custom_call.1} parent=1 // pred_region
      %42 = dma.done [#allocation5], 512
    $region37: #{tpu_custom_call.1} parent=1 // pred_fallthru
      _
    %v43 = vld [vmem:[%s2] sm:$0xff]
    %v44 = vld [vmem:[%s2 + $0x8] sm:$0xff]
    %v45 = vld [vmem:[%s2 + $0x10] sm:$0xff]
    %v46 = vld [vmem:[%s2 + $0x18] sm:$0xff]
    %v47 = vld [vmem:[%s0] sm:$0xff]
    %v48 = vld [vmem:[%s0 + $0x8] sm:$0xff]
    %v49 = vld [vmem:[%s0 + $0x10] sm:$0xff]
    %v50 = vld [vmem:[%s0 + $0x18] sm:$0xff]
    %v51 = vld [vmem:[%s0 + $0x20] sm:$0xff]
    %v52 = vld [vmem:[%s0 + $0x28] sm:$0xff]
    %v53 = vld [vmem:[%s0 + $0x30] sm:$0xff]
    %v54 = vld [vmem:[%s0 + $0x38] sm:$0xff]
    %v55 = vld [vmem:[%s1] sm:$0xf]
    %v56 = vld [vmem:[%s3] sm:$0x1]
    %v58 = vlaneseq
    %v59 = vshrl.u32 %v58, 7
    %v60 = vsub.s32 0, %v59
    %v61 = vrot.slane %v56, %v60
    %vm63 = vcmask 31744
    %v65 = vsel %vm63, %v47, 0
    %v68 = vsel %vm63, %v48, 0
    %v71 = vsel %vm63, %v49, 0
    %v74 = vsel %vm63, %v50, 0
    %v77 = vsel %vm63, %v51, 0
    %v80 = vsel %vm63, %v52, 0
    %v83 = vsel %vm63, %v53, 0
    %v86 = vsel %vm63, %v54, 0
    %vm88 = vcmask 1043456
    %v90 = vsel %vm88, %v55, 0
    %92 = vmatprep.subr.mxu0 0.0
    %93 = vmatpush1.msra.mxu0 0.0
    %94 = vmatprep.subr.mxu0 0.0
    %95 = vmatpush1.msra.mxu0 0.0
    %96 = vmatprep.subr.mxu0 0.0
    %97 = vmatpush1.msra.mxu0 0.0
    %98 = vmatprep.subr.mxu0 0.0
    %99 = vmatpush1.msra.mxu0 0.0
    %100 = vmatprep.subr.mxu0 0.0
    %101 = vmatpush1.msra.mxu0 0.0
    %102 = vmatprep.subr.mxu0 0.0
    %103 = vmatpush1.msra.mxu0 0.0
    %104 = vmatprep.subr.mxu0 0.0
    %105 = vmatpush1.msra.mxu0 0.0
    %106 = vmatprep.subr.mxu0 0.0
    %107 = vmatpush1.msra.mxu0 0.0
    %108 = vmatprep.subr.mxu0 0.0
    %109 = vmatpush1.msra.mxu0 0.0
    %110 = vmatprep.subr.mxu0 0.0
    %111 = vmatpush1.msra.mxu0 0.0
    %112 = vmatprep.subr.mxu0 0.0
    %113 = vmatpush1.msra.mxu0 0.0
    %114 = vmatprep.subr.mxu0 0.0
    %115 = vmatpush1.msra.mxu0 0.0
    %116 = vmatprep.subr.mxu0 0.0
    %117 = vmatpush1.msra.mxu0 0.0
    %118 = vmatprep.subr.mxu0 0.0
    %119 = vmatpush1.msra.mxu0 0.0
    %120 = vmatprep.subr.mxu0 0.0
    %121 = vmatpush1.msra.mxu0 0.0
    %122 = vmatprep.subr.mxu0 0.0
    %123 = vmatpush1.msra.mxu0 %v90
    %124 = vmatprep.subr.mxu0 0.0
    %125 = vmatpush2.msra.mxu0 0.0
    %126 = vmatprep.subr.mxu0 0.0
    %127 = vmatpush2.msra.mxu0 0.0
    %128 = vmatprep.subr.mxu0 0.0
    %129 = vmatpush2.msra.mxu0 0.0
    %130 = vmatprep.subr.mxu0 0.0
    %131 = vmatpush2.msra.mxu0 0.0
    %132 = vmatprep.subr.mxu0 0.0
    %133 = vmatpush2.msra.mxu0 0.0
    %134 = vmatprep.subr.mxu0 0.0
    %135 = vmatpush2.msra.mxu0 0.0
    %136 = vmatprep.subr.mxu0 0.0
    %137 = vmatpush2.msra.mxu0 0.0
    %138 = vmatprep.subr.mxu0 0.0
    %139 = vmatpush2.msra.mxu0 0.0
    %140 = vmatprep.subr.mxu0 0.0
    %141 = vmatpush2.msra.mxu0 0.0
    %142 = vmatprep.subr.mxu0 0.0
    %143 = vmatpush2.msra.mxu0 0.0
    %144 = vmatprep.subr.mxu0 0.0
    %145 = vmatpush2.msra.mxu0 0.0
    %146 = vmatprep.subr.mxu0 0.0
    %147 = vmatpush2.msra.mxu0 0.0
    %148 = vmatprep.subr.mxu0 0.0
    %149 = vmatpush2.msra.mxu0 0.0
    %150 = vmatprep.subr.mxu0 0.0
    %151 = vmatpush2.msra.mxu0 0.0
    %152 = vmatprep.subr.mxu0 0.0
    %153 = vmatpush2.msra.mxu0 0.0
    %154 = vmatprep.subr.mxu0 0.0
    %155 = vmatpush2.msra.mxu0 0.0
    %156 = vmatprep.mubr.f32.mxu0 0.0
    %157 = vmatmul.mubr.f32.gmra.mxu0 %v65
    %v158 = vpop.f32.mrf.mxu0
    %v159 = vadd.f32 %v61, %v158
    %v160 = vpop.f32.mrf.mxu0
    %161 = vmatprep.mubr.f32.mxu0 0.0
    %162 = vmatmul.mubr.f32.gmra.mxu0 %v68
    %v163 = vpop.f32.mrf.mxu0
    %v164 = vadd.f32 %v61, %v163
    %v165 = vpop.f32.mrf.mxu0
    %166 = vmatprep.mubr.f32.mxu0 0.0
    %167 = vmatmul.mubr.f32.gmra.mxu0 %v71
    %v168 = vpop.f32.mrf.mxu0
    %v169 = vadd.f32 %v61, %v168
    %v170 = vpop.f32.mrf.mxu0
    %171 = vmatprep.mubr.f32.mxu0 0.0
    %172 = vmatmul.mubr.f32.gmra.mxu0 %v74
    %v173 = vpop.f32.mrf.mxu0
    %v174 = vadd.f32 %v61, %v173
    %v175 = vpop.f32.mrf.mxu0
    %176 = vmatprep.mubr.f32.mxu0 0.0
    %177 = vmatmul.mubr.f32.gmra.mxu0 %v77
    %v178 = vpop.f32.mrf.mxu0
    %v179 = vadd.f32 %v61, %v178
    %v180 = vpop.f32.mrf.mxu0
    %181 = vmatprep.mubr.f32.mxu0 0.0
    %182 = vmatmul.mubr.f32.gmra.mxu0 %v80
    %v183 = vpop.f32.mrf.mxu0
    %v184 = vadd.f32 %v61, %v183
    %v185 = vpop.f32.mrf.mxu0
    %186 = vmatprep.mubr.f32.mxu0 0.0
    %187 = vmatmul.mubr.f32.gmra.mxu0 %v83
    %v188 = vpop.f32.mrf.mxu0
    %v189 = vadd.f32 %v61, %v188
    %v190 = vpop.f32.mrf.mxu0
    %191 = vmatprep.mubr.f32.mxu0 0.0
    %192 = vmatmul.mubr.f32.gmra.mxu0 %v86
    %v193 = vpop.f32.mrf.mxu0
    %v194 = vadd.f32 %v61, %v193
    %v195 = vpop.f32.mrf.mxu0
    %196 = vdwg.mxu0
    %197 = vst [vmem:[#allocation3] sm:$0xff] %v159
    %198 = vst [vmem:[#allocation3 + $0x8] sm:$0xff] %v164
    %199 = vst [vmem:[#allocation3 + $0x10] sm:$0xff] %v169
    %200 = vst [vmem:[#allocation3 + $0x18] sm:$0xff] %v174
    %201 = vst [vmem:[#allocation3 + $0x20] sm:$0xff] %v179
    %202 = vst [vmem:[#allocation3 + $0x28] sm:$0xff] %v184
    %203 = vst [vmem:[#allocation3 + $0x30] sm:$0xff] %v189
    %204 = vst [vmem:[#allocation3 + $0x38] sm:$0xff] %v194
    %v205 = vld [vmem:[#allocation3] sm:$0xff]
    %vm206 = vcmask 261120
    %v208 = vsel %vm206, 0.0, 0
    %210 = vmatprep.subr.mxu0 0.0
    %211 = vmatpush1.msra.mxu0 0.0
    %212 = vmatprep.subr.mxu0 0.0
    %213 = vmatpush1.msra.mxu0 0.0
    %214 = vmatprep.subr.mxu0 0.0
    %215 = vmatpush1.msra.mxu0 0.0
    %216 = vmatprep.subr.mxu0 0.0
    %217 = vmatpush1.msra.mxu0 0.0
    %218 = vmatprep.subr.mxu0 0.0
    %219 = vmatpush1.msra.mxu0 0.0
    %220 = vmatprep.subr.mxu0 0.0
    %221 = vmatpush1.msra.mxu0 0.0
    %222 = vmatprep.subr.mxu0 0.0
    %223 = vmatpush1.msra.mxu0 0.0
    %224 = vmatprep.subr.mxu0 0.0
    %225 = vmatpush1.msra.mxu0 0.0
    %226 = vmatprep.subr.mxu0 0.0
    %227 = vmatpush1.msra.mxu0 0.0
    %228 = vmatprep.subr.mxu0 0.0
    %229 = vmatpush1.msra.mxu0 0.0
    %230 = vmatprep.subr.mxu0 0.0
    %231 = vmatpush1.msra.mxu0 0.0
    %232 = vmatprep.subr.mxu0 0.0
    %233 = vmatpush1.msra.mxu0 0.0
    %234 = vmatprep.subr.mxu0 0.0
    %235 = vmatpush1.msra.mxu0 %v46
    %236 = vmatprep.subr.mxu0 0.0
    %237 = vmatpush1.msra.mxu0 %v45
    %238 = vmatprep.subr.mxu0 0.0
    %239 = vmatpush1.msra.mxu0 %v44
    %240 = vmatprep.subr.mxu0 0.0
    %241 = vmatpush1.msra.mxu0 %v43
    %242 = vmatprep.subr.mxu0 0.0
    %243 = vmatpush2.msra.mxu0 0.0
    %244 = vmatprep.subr.mxu0 0.0
    %245 = vmatpush2.msra.mxu0 0.0
    %246 = vmatprep.subr.mxu0 0.0
    %247 = vmatpush2.msra.mxu0 0.0
    %248 = vmatprep.subr.mxu0 0.0
    %249 = vmatpush2.msra.mxu0 0.0
    %250 = vmatprep.subr.mxu0 0.0
    %251 = vmatpush2.msra.mxu0 0.0
    %252 = vmatprep.subr.mxu0 0.0
    %253 = vmatpush2.msra.mxu0 0.0
    %254 = vmatprep.subr.mxu0 0.0
    %255 = vmatpush2.msra.mxu0 0.0
    %256 = vmatprep.subr.mxu0 0.0
    %257 = vmatpush2.msra.mxu0 0.0
    %258 = vmatprep.subr.mxu0 0.0
    %259 = vmatpush2.msra.mxu0 0.0
    %260 = vmatprep.subr.mxu0 0.0
    %261 = vmatpush2.msra.mxu0 0.0
    %262 = vmatprep.subr.mxu0 0.0
    %263 = vmatpush2.msra.mxu0 0.0
    %264 = vmatprep.subr.mxu0 0.0
    %265 = vmatpush2.msra.mxu0 0.0
    %266 = vmatprep.subr.mxu0 0.0
    %267 = vmatpush2.msra.mxu0 0.0
    %268 = vmatprep.subr.mxu0 0.0
    %269 = vmatpush2.msra.mxu0 0.0
    %270 = vmatprep.subr.mxu0 0.0
    %271 = vmatpush2.msra.mxu0 0.0
    %272 = vmatprep.subr.mxu0 0.0
    %273 = vmatpush2.msra.mxu0 0.0
    %274 = vmatprep.mubr.f32.mxu0 0.0
    %275 = vmatmul.mubr.f32.gmra.mxu0 %v208
    %v276 = vpop.f32.mrf.mxu0
    %v277 = vadd.f32 0.0, %v276
    %v278 = vpop.f32.mrf.mxu0
    %279 = vdwg.mxu0
    %v280 = vadd.f32 %v205, %v277
    %v281 = vtanh.pop %v280
    %v282 = vmul.f32 %v281, 0.5
    %v283 = vadd.f32 %v282, 0.5
    %v284 = vmul.f32 %v283, 0.0
    %286 = vrot.lane.b32.xlu0 %v281, 32
    %v287 = vpop.permute.xlu0 %286
    %v289 = vmul.f32 %v283, %v287
    %291 = vrot.lane.b32.xlu0 %v289, 32
    %v292 = vpop.permute.xlu0 %291
    %v294 = vadd.f32 %v284, %v292
    %v295 = vtanh.pop %v294
    %297 = vrot.lane.b32.xlu0 %v295, 32
    %v298 = vpop.permute.xlu0 %297
    %v300 = vmul.f32 %v283, %v298
    %302 = vrot.lane.b32.xlu0 %v300, 64
    %v303 = vpop.permute.xlu0 %302
    %305 = vst.msk [vmem:[#allocation2] sm:$0xff] %vm206, %v303
    %s306 = scalar_lea.vmem [#allocation3], 8
    %v307 = vld [vmem:[%s306] sm:$0xff]
    %v308 = vsel %vm206, %v303, 0
    %310 = vmatprep.subr.mxu0 0.0
    %311 = vmatpush1.msra.mxu0 0.0
    %312 = vmatprep.subr.mxu0 0.0
    %313 = vmatpush1.msra.mxu0 0.0
    %314 = vmatprep.subr.mxu0 0.0
    %315 = vmatpush1.msra.mxu0 0.0
    %316 = vmatprep.subr.mxu0 0.0
    %317 = vmatpush1.msra.mxu0 0.0
    %318 = vmatprep.subr.mxu0 0.0
    %319 = vmatpush1.msra.mxu0 0.0
    %320 = vmatprep.subr.mxu0 0.0
    %321 = vmatpush1.msra.mxu0 0.0
    %322 = vmatprep.subr.mxu0 0.0
    %323 = vmatpush1.msra.mxu0 0.0
    %324 = vmatprep.subr.mxu0 0.0
    %325 = vmatpush1.msra.mxu0 0.0
    %326 = vmatprep.subr.mxu0 0.0
    %327 = vmatpush1.msra.mxu0 0.0
    %328 = vmatprep.subr.mxu0 0.0
    %329 = vmatpush1.msra.mxu0 0.0
    %330 = vmatprep.subr.mxu0 0.0
    %331 = vmatpush1.msra.mxu0 0.0
    %332 = vmatprep.subr.mxu0 0.0
    %333 = vmatpush1.msra.mxu0 0.0
    %334 = vmatprep.subr.mxu0 0.0
    %335 = vmatpush1.msra.mxu0 %v46
    %336 = vmatprep.subr.mxu0 0.0
    %337 = vmatpush1.msra.mxu0 %v45
    %338 = vmatprep.subr.mxu0 0.0
    %339 = vmatpush1.msra.mxu0 %v44
    %340 = vmatprep.subr.mxu0 0.0
    %341 = vmatpush1.msra.mxu0 %v43
    %342 = vmatprep.subr.mxu0 0.0
    %343 = vmatpush2.msra.mxu0 0.0
    %344 = vmatprep.subr.mxu0 0.0
    %345 = vmatpush2.msra.mxu0 0.0
    %346 = vmatprep.subr.mxu0 0.0
    %347 = vmatpush2.msra.mxu0 0.0
    %348 = vmatprep.subr.mxu0 0.0
    %349 = vmatpush2.msra.mxu0 0.0
    %350 = vmatprep.subr.mxu0 0.0
    %351 = vmatpush2.msra.mxu0 0.0
    %352 = vmatprep.subr.mxu0 0.0
    %353 = vmatpush2.msra.mxu0 0.0
    %354 = vmatprep.subr.mxu0 0.0
    %355 = vmatpush2.msra.mxu0 0.0
    %356 = vmatprep.subr.mxu0 0.0
    %357 = vmatpush2.msra.mxu0 0.0
    %358 = vmatprep.subr.mxu0 0.0
    %359 = vmatpush2.msra.mxu0 0.0
    %360 = vmatprep.subr.mxu0 0.0
    %361 = vmatpush2.msra.mxu0 0.0
    %362 = vmatprep.subr.mxu0 0.0
    %363 = vmatpush2.msra.mxu0 0.0
    %364 = vmatprep.subr.mxu0 0.0
    %365 = vmatpush2.msra.mxu0 0.0
    %366 = vmatprep.subr.mxu0 0.0
    %367 = vmatpush2.msra.mxu0 0.0
    %368 = vmatprep.subr.mxu0 0.0
    %369 = vmatpush2.msra.mxu0 0.0
    %370 = vmatprep.subr.mxu0 0.0
    %371 = vmatpush2.msra.mxu0 0.0
    %372 = vmatprep.subr.mxu0 0.0
    %373 = vmatpush2.msra.mxu0 0.0
    %374 = vmatprep.mubr.f32.mxu0 0.0
    %375 = vmatmul.mubr.f32.gmra.mxu0 %v308
    %v376 = vpop.f32.mrf.mxu0
    %v377 = vadd.f32 0.0, %v376
    %v378 = vpop.f32.mrf.mxu0
    %379 = vdwg.mxu0
    %v380 = vadd.f32 %v307, %v377
    %v381 = vtanh.pop %v380
    %v382 = vmul.f32 %v381, 0.5
    %v383 = vadd.f32 %v382, 0.5
    %v384 = vmul.f32 %v383, %v294
    %386 = vrot.lane.b32.xlu0 %v381, 32
    %v387 = vpop.permute.xlu0 %386
    %v389 = vmul.f32 %v383, %v387
    %391 = vrot.lane.b32.xlu0 %v389, 32
    %v392 = vpop.permute.xlu0 %391
    %v394 = vadd.f32 %v384, %v392
    %v395 = vtanh.pop %v394
    %397 = vrot.lane.b32.xlu0 %v395, 32
    %v398 = vpop.permute.xlu0 %397
    %v400 = vmul.f32 %v383, %v398
    %402 = vrot.lane.b32.xlu0 %v400, 64
    %v403 = vpop.permute.xlu0 %402
    %s405 = scalar_lea.vmem [#allocation2], 8
    %406 = vst.msk [vmem:[%s405] sm:$0xff] %vm206, %v403
    %s407 = scalar_lea.vmem [#allocation3], 16
    %v408 = vld [vmem:[%s407] sm:$0xff]
    %v409 = vsel %vm206, %v403, 0
    %411 = vmatprep.subr.mxu0 0.0
    %412 = vmatpush1.msra.mxu0 0.0
    %413 = vmatprep.subr.mxu0 0.0
    %414 = vmatpush1.msra.mxu0 0.0
    %415 = vmatprep.subr.mxu0 0.0
    %416 = vmatpush1.msra.mxu0 0.0
    %417 = vmatprep.subr.mxu0 0.0
    %418 = vmatpush1.msra.mxu0 0.0
    %419 = vmatprep.subr.mxu0 0.0
    %420 = vmatpush1.msra.mxu0 0.0
    %421 = vmatprep.subr.mxu0 0.0
    %422 = vmatpush1.msra.mxu0 0.0
    %423 = vmatprep.subr.mxu0 0.0
    %424 = vmatpush1.msra.mxu0 0.0
    %425 = vmatprep.subr.mxu0 0.0
    %426 = vmatpush1.msra.mxu0 0.0
    %427 = vmatprep.subr.mxu0 0.0
    %428 = vmatpush1.msra.mxu0 0.0
    %429 = vmatprep.subr.mxu0 0.0
    %430 = vmatpush1.msra.mxu0 0.0
    %431 = vmatprep.subr.mxu0 0.0
    %432 = vmatpush1.msra.mxu0 0.0
    %433 = vmatprep.subr.mxu0 0.0
    %434 = vmatpush1.msra.mxu0 0.0
    %435 = vmatprep.subr.mxu0 0.0
    %436 = vmatpush1.msra.mxu0 %v46
    %437 = vmatprep.subr.mxu0 0.0
    %438 = vmatpush1.msra.mxu0 %v45
    %439 = vmatprep.subr.mxu0 0.0
    %440 = vmatpush1.msra.mxu0 %v44
    %441 = vmatprep.subr.mxu0 0.0
    %442 = vmatpush1.msra.mxu0 %v43
    %443 = vmatprep.subr.mxu0 0.0
    %444 = vmatpush2.msra.mxu0 0.0
    %445 = vmatprep.subr.mxu0 0.0
    %446 = vmatpush2.msra.mxu0 0.0
    %447 = vmatprep.subr.mxu0 0.0
    %448 = vmatpush2.msra.mxu0 0.0
    %449 = vmatprep.subr.mxu0 0.0
    %450 = vmatpush2.msra.mxu0 0.0
    %451 = vmatprep.subr.mxu0 0.0
    %452 = vmatpush2.msra.mxu0 0.0
    %453 = vmatprep.subr.mxu0 0.0
    %454 = vmatpush2.msra.mxu0 0.0
    %455 = vmatprep.subr.mxu0 0.0
    %456 = vmatpush2.msra.mxu0 0.0
    %457 = vmatprep.subr.mxu0 0.0
    %458 = vmatpush2.msra.mxu0 0.0
    %459 = vmatprep.subr.mxu0 0.0
    %460 = vmatpush2.msra.mxu0 0.0
    %461 = vmatprep.subr.mxu0 0.0
    %462 = vmatpush2.msra.mxu0 0.0
    %463 = vmatprep.subr.mxu0 0.0
    %464 = vmatpush2.msra.mxu0 0.0
    %465 = vmatprep.subr.mxu0 0.0
    %466 = vmatpush2.msra.mxu0 0.0
    %467 = vmatprep.subr.mxu0 0.0
    %468 = vmatpush2.msra.mxu0 0.0
    %469 = vmatprep.subr.mxu0 0.0
    %470 = vmatpush2.msra.mxu0 0.0
    %471 = vmatprep.subr.mxu0 0.0
    %472 = vmatpush2.msra.mxu0 0.0
    %473 = vmatprep.subr.mxu0 0.0
    %474 = vmatpush2.msra.mxu0 0.0
    %475 = vmatprep.mubr.f32.mxu0 0.0
    %476 = vmatmul.mubr.f32.gmra.mxu0 %v409
    %v477 = vpop.f32.mrf.mxu0
    %v478 = vadd.f32 0.0, %v477
    %v479 = vpop.f32.mrf.mxu0
    %480 = vdwg.mxu0
    %v481 = vadd.f32 %v408, %v478
    %v482 = vtanh.pop %v481
    %v483 = vmul.f32 %v482, 0.5
    %v484 = vadd.f32 %v483, 0.5
    %v485 = vmul.f32 %v484, %v394
    %487 = vrot.lane.b32.xlu0 %v482, 32
    %v488 = vpop.permute.xlu0 %487
    %v490 = vmul.f32 %v484, %v488
    %492 = vrot.lane.b32.xlu0 %v490, 32
    %v493 = vpop.permute.xlu0 %492
    %v495 = vadd.f32 %v485, %v493
    %v496 = vtanh.pop %v495
    %498 = vrot.lane.b32.xlu0 %v496, 32
    %v499 = vpop.permute.xlu0 %498
    %v501 = vmul.f32 %v484, %v499
    %503 = vrot.lane.b32.xlu0 %v501, 64
    %v504 = vpop.permute.xlu0 %503
    %s506 = scalar_lea.vmem [#allocation2], 16
    %507 = vst.msk [vmem:[%s506] sm:$0xff] %vm206, %v504
    %s508 = scalar_lea.vmem [#allocation3], 24
    %v509 = vld [vmem:[%s508] sm:$0xff]
    %v510 = vsel %vm206, %v504, 0
    %512 = vmatprep.subr.mxu0 0.0
    %513 = vmatpush1.msra.mxu0 0.0
    %514 = vmatprep.subr.mxu0 0.0
    %515 = vmatpush1.msra.mxu0 0.0
    %516 = vmatprep.subr.mxu0 0.0
    %517 = vmatpush1.msra.mxu0 0.0
    %518 = vmatprep.subr.mxu0 0.0
    %519 = vmatpush1.msra.mxu0 0.0
    %520 = vmatprep.subr.mxu0 0.0
    %521 = vmatpush1.msra.mxu0 0.0
    %522 = vmatprep.subr.mxu0 0.0
    %523 = vmatpush1.msra.mxu0 0.0
    %524 = vmatprep.subr.mxu0 0.0
    %525 = vmatpush1.msra.mxu0 0.0
    %526 = vmatprep.subr.mxu0 0.0
    %527 = vmatpush1.msra.mxu0 0.0
    %528 = vmatprep.subr.mxu0 0.0
    %529 = vmatpush1.msra.mxu0 0.0
    %530 = vmatprep.subr.mxu0 0.0
    %531 = vmatpush1.msra.mxu0 0.0
    %532 = vmatprep.subr.mxu0 0.0
    %533 = vmatpush1.msra.mxu0 0.0
    %534 = vmatprep.subr.mxu0 0.0
    %535 = vmatpush1.msra.mxu0 0.0
    %536 = vmatprep.subr.mxu0 0.0
    %537 = vmatpush1.msra.mxu0 %v46
    %538 = vmatprep.subr.mxu0 0.0
    %539 = vmatpush1.msra.mxu0 %v45
    %540 = vmatprep.subr.mxu0 0.0
    %541 = vmatpush1.msra.mxu0 %v44
    %542 = vmatprep.subr.mxu0 0.0
    %543 = vmatpush1.msra.mxu0 %v43
    %544 = vmatprep.subr.mxu0 0.0
    %545 = vmatpush2.msra.mxu0 0.0
    %546 = vmatprep.subr.mxu0 0.0
    %547 = vmatpush2.msra.mxu0 0.0
    %548 = vmatprep.subr.mxu0 0.0
    %549 = vmatpush2.msra.mxu0 0.0
    %550 = vmatprep.subr.mxu0 0.0
    %551 = vmatpush2.msra.mxu0 0.0
    %552 = vmatprep.subr.mxu0 0.0
    %553 = vmatpush2.msra.mxu0 0.0
    %554 = vmatprep.subr.mxu0 0.0
    %555 = vmatpush2.msra.mxu0 0.0
    %556 = vmatprep.subr.mxu0 0.0
    %557 = vmatpush2.msra.mxu0 0.0
    %558 = vmatprep.subr.mxu0 0.0
    %559 = vmatpush2.msra.mxu0 0.0
    %560 = vmatprep.subr.mxu0 0.0
    %561 = vmatpush2.msra.mxu0 0.0
    %562 = vmatprep.subr.mxu0 0.0
    %563 = vmatpush2.msra.mxu0 0.0
    %564 = vmatprep.subr.mxu0 0.0
    %565 = vmatpush2.msra.mxu0 0.0
    %566 = vmatprep.subr.mxu0 0.0
    %567 = vmatpush2.msra.mxu0 0.0
    %568 = vmatprep.subr.mxu0 0.0
    %569 = vmatpush2.msra.mxu0 0.0
    %570 = vmatprep.subr.mxu0 0.0
    %571 = vmatpush2.msra.mxu0 0.0
    %572 = vmatprep.subr.mxu0 0.0
    %573 = vmatpush2.msra.mxu0 0.0
    %574 = vmatprep.subr.mxu0 0.0
    %575 = vmatpush2.msra.mxu0 0.0
    %576 = vmatprep.mubr.f32.mxu0 0.0
    %577 = vmatmul.mubr.f32.gmra.mxu0 %v510
    %v578 = vpop.f32.mrf.mxu0
    %v579 = vadd.f32 0.0, %v578
    %v580 = vpop.f32.mrf.mxu0
    %581 = vdwg.mxu0
    %v582 = vadd.f32 %v509, %v579
    %v583 = vtanh.pop %v582
    %v584 = vmul.f32 %v583, 0.5
    %v585 = vadd.f32 %v584, 0.5
    %v586 = vmul.f32 %v585, %v495
    %588 = vrot.lane.b32.xlu0 %v583, 32
    %v589 = vpop.permute.xlu0 %588
    %v591 = vmul.f32 %v585, %v589
    %593 = vrot.lane.b32.xlu0 %v591, 32
    %v594 = vpop.permute.xlu0 %593
    %v596 = vadd.f32 %v586, %v594
    %v597 = vtanh.pop %v596
    %599 = vrot.lane.b32.xlu0 %v597, 32
    %v600 = vpop.permute.xlu0 %599
    %v602 = vmul.f32 %v585, %v600
    %604 = vrot.lane.b32.xlu0 %v602, 64
    %v605 = vpop.permute.xlu0 %604
    %s607 = scalar_lea.vmem [#allocation2], 24
    %608 = vst.msk [vmem:[%s607] sm:$0xff] %vm206, %v605
    %s609 = scalar_lea.vmem [#allocation3], 32
    %v610 = vld [vmem:[%s609] sm:$0xff]
    %v611 = vsel %vm206, %v605, 0
    %613 = vmatprep.subr.mxu0 0.0
    %614 = vmatpush1.msra.mxu0 0.0
    %615 = vmatprep.subr.mxu0 0.0
    %616 = vmatpush1.msra.mxu0 0.0
    %617 = vmatprep.subr.mxu0 0.0
    %618 = vmatpush1.msra.mxu0 0.0
    %619 = vmatprep.subr.mxu0 0.0
    %620 = vmatpush1.msra.mxu0 0.0
    %621 = vmatprep.subr.mxu0 0.0
    %622 = vmatpush1.msra.mxu0 0.0
    %623 = vmatprep.subr.mxu0 0.0
    %624 = vmatpush1.msra.mxu0 0.0
    %625 = vmatprep.subr.mxu0 0.0
    %626 = vmatpush1.msra.mxu0 0.0
    %627 = vmatprep.subr.mxu0 0.0
    %628 = vmatpush1.msra.mxu0 0.0
    %629 = vmatprep.subr.mxu0 0.0
    %630 = vmatpush1.msra.mxu0 0.0
    %631 = vmatprep.subr.mxu0 0.0
    %632 = vmatpush1.msra.mxu0 0.0
    %633 = vmatprep.subr.mxu0 0.0
    %634 = vmatpush1.msra.mxu0 0.0
    %635 = vmatprep.subr.mxu0 0.0
    %636 = vmatpush1.msra.mxu0 0.0
    %637 = vmatprep.subr.mxu0 0.0
    %638 = vmatpush1.msra.mxu0 %v46
    %639 = vmatprep.subr.mxu0 0.0
    %640 = vmatpush1.msra.mxu0 %v45
    %641 = vmatprep.subr.mxu0 0.0
    %642 = vmatpush1.msra.mxu0 %v44
    %643 = vmatprep.subr.mxu0 0.0
    %644 = vmatpush1.msra.mxu0 %v43
    %645 = vmatprep.subr.mxu0 0.0
    %646 = vmatpush2.msra.mxu0 0.0
    %647 = vmatprep.subr.mxu0 0.0
    %648 = vmatpush2.msra.mxu0 0.0
    %649 = vmatprep.subr.mxu0 0.0
    %650 = vmatpush2.msra.mxu0 0.0
    %651 = vmatprep.subr.mxu0 0.0
    %652 = vmatpush2.msra.mxu0 0.0
    %653 = vmatprep.subr.mxu0 0.0
    %654 = vmatpush2.msra.mxu0 0.0
    %655 = vmatprep.subr.mxu0 0.0
    %656 = vmatpush2.msra.mxu0 0.0
    %657 = vmatprep.subr.mxu0 0.0
    %658 = vmatpush2.msra.mxu0 0.0
    %659 = vmatprep.subr.mxu0 0.0
    %660 = vmatpush2.msra.mxu0 0.0
    %661 = vmatprep.subr.mxu0 0.0
    %662 = vmatpush2.msra.mxu0 0.0
    %663 = vmatprep.subr.mxu0 0.0
    %664 = vmatpush2.msra.mxu0 0.0
    %665 = vmatprep.subr.mxu0 0.0
    %666 = vmatpush2.msra.mxu0 0.0
    %667 = vmatprep.subr.mxu0 0.0
    %668 = vmatpush2.msra.mxu0 0.0
    %669 = vmatprep.subr.mxu0 0.0
    %670 = vmatpush2.msra.mxu0 0.0
    %671 = vmatprep.subr.mxu0 0.0
    %672 = vmatpush2.msra.mxu0 0.0
    %673 = vmatprep.subr.mxu0 0.0
    %674 = vmatpush2.msra.mxu0 0.0
    %675 = vmatprep.subr.mxu0 0.0
    %676 = vmatpush2.msra.mxu0 0.0
    %677 = vmatprep.mubr.f32.mxu0 0.0
    %678 = vmatmul.mubr.f32.gmra.mxu0 %v611
    %v679 = vpop.f32.mrf.mxu0
    %v680 = vadd.f32 0.0, %v679
    %v681 = vpop.f32.mrf.mxu0
    %682 = vdwg.mxu0
    %v683 = vadd.f32 %v610, %v680
    %v684 = vtanh.pop %v683
    %v685 = vmul.f32 %v684, 0.5
    %v686 = vadd.f32 %v685, 0.5
    %v687 = vmul.f32 %v686, %v596
    %689 = vrot.lane.b32.xlu0 %v684, 32
    %v690 = vpop.permute.xlu0 %689
    %v692 = vmul.f32 %v686, %v690
    %694 = vrot.lane.b32.xlu0 %v692, 32
    %v695 = vpop.permute.xlu0 %694
    %v697 = vadd.f32 %v687, %v695
    %v698 = vtanh.pop %v697
    %700 = vrot.lane.b32.xlu0 %v698, 32
    %v701 = vpop.permute.xlu0 %700
    %v703 = vmul.f32 %v686, %v701
    %705 = vrot.lane.b32.xlu0 %v703, 64
    %v706 = vpop.permute.xlu0 %705
    %s708 = scalar_lea.vmem [#allocation2], 32
    %709 = vst.msk [vmem:[%s708] sm:$0xff] %vm206, %v706
    %s710 = scalar_lea.vmem [#allocation3], 40
    %v711 = vld [vmem:[%s710] sm:$0xff]
    %v712 = vsel %vm206, %v706, 0
    %714 = vmatprep.subr.mxu0 0.0
    %715 = vmatpush1.msra.mxu0 0.0
    %716 = vmatprep.subr.mxu0 0.0
    %717 = vmatpush1.msra.mxu0 0.0
    %718 = vmatprep.subr.mxu0 0.0
    %719 = vmatpush1.msra.mxu0 0.0
    %720 = vmatprep.subr.mxu0 0.0
    %721 = vmatpush1.msra.mxu0 0.0
    %722 = vmatprep.subr.mxu0 0.0
    %723 = vmatpush1.msra.mxu0 0.0
    %724 = vmatprep.subr.mxu0 0.0
    %725 = vmatpush1.msra.mxu0 0.0
    %726 = vmatprep.subr.mxu0 0.0
    %727 = vmatpush1.msra.mxu0 0.0
    %728 = vmatprep.subr.mxu0 0.0
    %729 = vmatpush1.msra.mxu0 0.0
    %730 = vmatprep.subr.mxu0 0.0
    %731 = vmatpush1.msra.mxu0 0.0
    %732 = vmatprep.subr.mxu0 0.0
    %733 = vmatpush1.msra.mxu0 0.0
    %734 = vmatprep.subr.mxu0 0.0
    %735 = vmatpush1.msra.mxu0 0.0
    %736 = vmatprep.subr.mxu0 0.0
    %737 = vmatpush1.msra.mxu0 0.0
    %738 = vmatprep.subr.mxu0 0.0
    %739 = vmatpush1.msra.mxu0 %v46
    %740 = vmatprep.subr.mxu0 0.0
    %741 = vmatpush1.msra.mxu0 %v45
    %742 = vmatprep.subr.mxu0 0.0
    %743 = vmatpush1.msra.mxu0 %v44
    %744 = vmatprep.subr.mxu0 0.0
    %745 = vmatpush1.msra.mxu0 %v43
    %746 = vmatprep.subr.mxu0 0.0
    %747 = vmatpush2.msra.mxu0 0.0
    %748 = vmatprep.subr.mxu0 0.0
    %749 = vmatpush2.msra.mxu0 0.0
    %750 = vmatprep.subr.mxu0 0.0
    %751 = vmatpush2.msra.mxu0 0.0
    %752 = vmatprep.subr.mxu0 0.0
    %753 = vmatpush2.msra.mxu0 0.0
    %754 = vmatprep.subr.mxu0 0.0
    %755 = vmatpush2.msra.mxu0 0.0
    %756 = vmatprep.subr.mxu0 0.0
    %757 = vmatpush2.msra.mxu0 0.0
    %758 = vmatprep.subr.mxu0 0.0
    %759 = vmatpush2.msra.mxu0 0.0
    %760 = vmatprep.subr.mxu0 0.0
    %761 = vmatpush2.msra.mxu0 0.0
    %762 = vmatprep.subr.mxu0 0.0
    %763 = vmatpush2.msra.mxu0 0.0
    %764 = vmatprep.subr.mxu0 0.0
    %765 = vmatpush2.msra.mxu0 0.0
    %766 = vmatprep.subr.mxu0 0.0
    %767 = vmatpush2.msra.mxu0 0.0
    %768 = vmatprep.subr.mxu0 0.0
    %769 = vmatpush2.msra.mxu0 0.0
    %770 = vmatprep.subr.mxu0 0.0
    %771 = vmatpush2.msra.mxu0 0.0
    %772 = vmatprep.subr.mxu0 0.0
    %773 = vmatpush2.msra.mxu0 0.0
    %774 = vmatprep.subr.mxu0 0.0
    %775 = vmatpush2.msra.mxu0 0.0
    %776 = vmatprep.subr.mxu0 0.0
    %777 = vmatpush2.msra.mxu0 0.0
    %778 = vmatprep.mubr.f32.mxu0 0.0
    %779 = vmatmul.mubr.f32.gmra.mxu0 %v712
    %v780 = vpop.f32.mrf.mxu0
    %v781 = vadd.f32 0.0, %v780
    %v782 = vpop.f32.mrf.mxu0
    %783 = vdwg.mxu0
    %v784 = vadd.f32 %v711, %v781
    %v785 = vtanh.pop %v784
    %v786 = vmul.f32 %v785, 0.5
    %v787 = vadd.f32 %v786, 0.5
    %v788 = vmul.f32 %v787, %v697
    %790 = vrot.lane.b32.xlu0 %v785, 32
    %v791 = vpop.permute.xlu0 %790
    %v793 = vmul.f32 %v787, %v791
    %795 = vrot.lane.b32.xlu0 %v793, 32
    %v796 = vpop.permute.xlu0 %795
    %v798 = vadd.f32 %v788, %v796
    %v799 = vtanh.pop %v798
    %801 = vrot.lane.b32.xlu0 %v799, 32
    %v802 = vpop.permute.xlu0 %801
    %v804 = vmul.f32 %v787, %v802
    %806 = vrot.lane.b32.xlu0 %v804, 64
    %v807 = vpop.permute.xlu0 %806
    %s809 = scalar_lea.vmem [#allocation2], 40
    %810 = vst.msk [vmem:[%s809] sm:$0xff] %vm206, %v807
    %s811 = scalar_lea.vmem [#allocation3], 48
    %v812 = vld [vmem:[%s811] sm:$0xff]
    %v813 = vsel %vm206, %v807, 0
    %815 = vmatprep.subr.mxu0 0.0
    %816 = vmatpush1.msra.mxu0 0.0
    %817 = vmatprep.subr.mxu0 0.0
    %818 = vmatpush1.msra.mxu0 0.0
    %819 = vmatprep.subr.mxu0 0.0
    %820 = vmatpush1.msra.mxu0 0.0
    %821 = vmatprep.subr.mxu0 0.0
    %822 = vmatpush1.msra.mxu0 0.0
    %823 = vmatprep.subr.mxu0 0.0
    %824 = vmatpush1.msra.mxu0 0.0
    %825 = vmatprep.subr.mxu0 0.0
    %826 = vmatpush1.msra.mxu0 0.0
    %827 = vmatprep.subr.mxu0 0.0
    %828 = vmatpush1.msra.mxu0 0.0
    %829 = vmatprep.subr.mxu0 0.0
    %830 = vmatpush1.msra.mxu0 0.0
    %831 = vmatprep.subr.mxu0 0.0
    %832 = vmatpush1.msra.mxu0 0.0
    %833 = vmatprep.subr.mxu0 0.0
    %834 = vmatpush1.msra.mxu0 0.0
    %835 = vmatprep.subr.mxu0 0.0
    %836 = vmatpush1.msra.mxu0 0.0
    %837 = vmatprep.subr.mxu0 0.0
    %838 = vmatpush1.msra.mxu0 0.0
    %839 = vmatprep.subr.mxu0 0.0
    %840 = vmatpush1.msra.mxu0 %v46
    %841 = vmatprep.subr.mxu0 0.0
    %842 = vmatpush1.msra.mxu0 %v45
    %843 = vmatprep.subr.mxu0 0.0
    %844 = vmatpush1.msra.mxu0 %v44
    %845 = vmatprep.subr.mxu0 0.0
    %846 = vmatpush1.msra.mxu0 %v43
    %847 = vmatprep.subr.mxu0 0.0
    %848 = vmatpush2.msra.mxu0 0.0
    %849 = vmatprep.subr.mxu0 0.0
    %850 = vmatpush2.msra.mxu0 0.0
    %851 = vmatprep.subr.mxu0 0.0
    %852 = vmatpush2.msra.mxu0 0.0
    %853 = vmatprep.subr.mxu0 0.0
    %854 = vmatpush2.msra.mxu0 0.0
    %855 = vmatprep.subr.mxu0 0.0
    %856 = vmatpush2.msra.mxu0 0.0
    %857 = vmatprep.subr.mxu0 0.0
    %858 = vmatpush2.msra.mxu0 0.0
    %859 = vmatprep.subr.mxu0 0.0
    %860 = vmatpush2.msra.mxu0 0.0
    %861 = vmatprep.subr.mxu0 0.0
    %862 = vmatpush2.msra.mxu0 0.0
    %863 = vmatprep.subr.mxu0 0.0
    %864 = vmatpush2.msra.mxu0 0.0
    %865 = vmatprep.subr.mxu0 0.0
    %866 = vmatpush2.msra.mxu0 0.0
    %867 = vmatprep.subr.mxu0 0.0
    %868 = vmatpush2.msra.mxu0 0.0
    %869 = vmatprep.subr.mxu0 0.0
    %870 = vmatpush2.msra.mxu0 0.0
    %871 = vmatprep.subr.mxu0 0.0
    %872 = vmatpush2.msra.mxu0 0.0
    %873 = vmatprep.subr.mxu0 0.0
    %874 = vmatpush2.msra.mxu0 0.0
    %875 = vmatprep.subr.mxu0 0.0
    %876 = vmatpush2.msra.mxu0 0.0
    %877 = vmatprep.subr.mxu0 0.0
    %878 = vmatpush2.msra.mxu0 0.0
    %879 = vmatprep.mubr.f32.mxu0 0.0
    %880 = vmatmul.mubr.f32.gmra.mxu0 %v813
    %v881 = vpop.f32.mrf.mxu0
    %v882 = vadd.f32 0.0, %v881
    %v883 = vpop.f32.mrf.mxu0
    %884 = vdwg.mxu0
    %v885 = vadd.f32 %v812, %v882
    %v886 = vtanh.pop %v885
    %v887 = vmul.f32 %v886, 0.5
    %v888 = vadd.f32 %v887, 0.5
    %v889 = vmul.f32 %v888, %v798
    %891 = vrot.lane.b32.xlu0 %v886, 32
    %v892 = vpop.permute.xlu0 %891
    %v894 = vmul.f32 %v888, %v892
    %896 = vrot.lane.b32.xlu0 %v894, 32
    %v897 = vpop.permute.xlu0 %896
    %v899 = vadd.f32 %v889, %v897
    %v900 = vtanh.pop %v899
    %902 = vrot.lane.b32.xlu0 %v900, 32
    %v903 = vpop.permute.xlu0 %902
    %v905 = vmul.f32 %v888, %v903
    %907 = vrot.lane.b32.xlu0 %v905, 64
    %v908 = vpop.permute.xlu0 %907
    %s910 = scalar_lea.vmem [#allocation2], 48
    %911 = vst.msk [vmem:[%s910] sm:$0xff] %vm206, %v908
    %s912 = scalar_lea.vmem [#allocation3], 56
    %v913 = vld [vmem:[%s912] sm:$0xff]
    %v914 = vsel %vm206, %v908, 0
    %916 = vmatprep.subr.mxu0 0.0
    %917 = vmatpush1.msra.mxu0 0.0
    %918 = vmatprep.subr.mxu0 0.0
    %919 = vmatpush1.msra.mxu0 0.0
    %920 = vmatprep.subr.mxu0 0.0
    %921 = vmatpush1.msra.mxu0 0.0
    %922 = vmatprep.subr.mxu0 0.0
    %923 = vmatpush1.msra.mxu0 0.0
    %924 = vmatprep.subr.mxu0 0.0
    %925 = vmatpush1.msra.mxu0 0.0
    %926 = vmatprep.subr.mxu0 0.0
    %927 = vmatpush1.msra.mxu0 0.0
    %928 = vmatprep.subr.mxu0 0.0
    %929 = vmatpush1.msra.mxu0 0.0
    %930 = vmatprep.subr.mxu0 0.0
    %931 = vmatpush1.msra.mxu0 0.0
    %932 = vmatprep.subr.mxu0 0.0
    %933 = vmatpush1.msra.mxu0 0.0
    %934 = vmatprep.subr.mxu0 0.0
    %935 = vmatpush1.msra.mxu0 0.0
    %936 = vmatprep.subr.mxu0 0.0
    %937 = vmatpush1.msra.mxu0 0.0
    %938 = vmatprep.subr.mxu0 0.0
    %939 = vmatpush1.msra.mxu0 0.0
    %940 = vmatprep.subr.mxu0 0.0
    %941 = vmatpush1.msra.mxu0 %v46
    %942 = vmatprep.subr.mxu0 0.0
    %943 = vmatpush1.msra.mxu0 %v45
    %944 = vmatprep.subr.mxu0 0.0
    %945 = vmatpush1.msra.mxu0 %v44
    %946 = vmatprep.subr.mxu0 0.0
    %947 = vmatpush1.msra.mxu0 %v43
    %948 = vmatprep.subr.mxu0 0.0
    %949 = vmatpush2.msra.mxu0 0.0
    %950 = vmatprep.subr.mxu0 0.0
    %951 = vmatpush2.msra.mxu0 0.0
    %952 = vmatprep.subr.mxu0 0.0
    %953 = vmatpush2.msra.mxu0 0.0
    %954 = vmatprep.subr.mxu0 0.0
    %955 = vmatpush2.msra.mxu0 0.0
    %956 = vmatprep.subr.mxu0 0.0
    %957 = vmatpush2.msra.mxu0 0.0
    %958 = vmatprep.subr.mxu0 0.0
    %959 = vmatpush2.msra.mxu0 0.0
    %960 = vmatprep.subr.mxu0 0.0
    %961 = vmatpush2.msra.mxu0 0.0
    %962 = vmatprep.subr.mxu0 0.0
    %963 = vmatpush2.msra.mxu0 0.0
    %964 = vmatprep.subr.mxu0 0.0
    %965 = vmatpush2.msra.mxu0 0.0
    %966 = vmatprep.subr.mxu0 0.0
    %967 = vmatpush2.msra.mxu0 0.0
    %968 = vmatprep.subr.mxu0 0.0
    %969 = vmatpush2.msra.mxu0 0.0
    %970 = vmatprep.subr.mxu0 0.0
    %971 = vmatpush2.msra.mxu0 0.0
    %972 = vmatprep.subr.mxu0 0.0
    %973 = vmatpush2.msra.mxu0 0.0
    %974 = vmatprep.subr.mxu0 0.0
    %975 = vmatpush2.msra.mxu0 0.0
    %976 = vmatprep.subr.mxu0 0.0
    %977 = vmatpush2.msra.mxu0 0.0
    %978 = vmatprep.subr.mxu0 0.0
    %979 = vmatpush2.msra.mxu0 0.0
    %980 = vmatprep.mubr.f32.mxu0 0.0
    %981 = vmatmul.mubr.f32.gmra.mxu0 %v914
    %v982 = vpop.f32.mrf.mxu0
    %v983 = vadd.f32 0.0, %v982
    %v984 = vpop.f32.mrf.mxu0
    %985 = vdwg.mxu0
    %v986 = vadd.f32 %v913, %v983
    %v987 = vtanh.pop %v986
    %v988 = vmul.f32 %v987, 0.5
    %v989 = vadd.f32 %v988, 0.5
    %v990 = vmul.f32 %v989, %v899
    %992 = vrot.lane.b32.xlu0 %v987, 32
    %v993 = vpop.permute.xlu0 %992
    %v995 = vmul.f32 %v989, %v993
    %997 = vrot.lane.b32.xlu0 %v995, 32
    %v998 = vpop.permute.xlu0 %997
    %v1000 = vadd.f32 %v990, %v998
    %v1001 = vtanh.pop %v1000
    %1003 = vrot.lane.b32.xlu0 %v1001, 32
    %v1004 = vpop.permute.xlu0 %1003
    %v1006 = vmul.f32 %v989, %v1004
    %1008 = vrot.lane.b32.xlu0 %v1006, 64
    %v1009 = vpop.permute.xlu0 %1008
    %s1011 = scalar_lea.vmem [#allocation2], 56
    %1012 = vst.msk [vmem:[%s1011] sm:$0xff] %vm206, %v1009
    %v1013 = vld [vmem:[#allocation4] sm:$0xff]
    %v1014 = vld [vmem:[#allocation4 + $0x8] sm:$0xff]
    %v1015 = vld [vmem:[#allocation4 + $0x10] sm:$0xff]
    %v1016 = vld [vmem:[#allocation4 + $0x18] sm:$0xff]
    %v1017 = vld [vmem:[#allocation2] sm:$0xff]
    %v1018 = vld [vmem:[#allocation2 + $0x8] sm:$0xff]
    %v1019 = vld [vmem:[#allocation2 + $0x10] sm:$0xff]
    %v1020 = vld [vmem:[#allocation2 + $0x18] sm:$0xff]
    %v1021 = vld [vmem:[#allocation2 + $0x20] sm:$0xff]
    %v1022 = vld [vmem:[#allocation2 + $0x28] sm:$0xff]
    %v1023 = vld [vmem:[#allocation2 + $0x30] sm:$0xff]
    %v1024 = vld [vmem:[#allocation2 + $0x38] sm:$0xff]
    %v1025 = vld [vmem:[%s4] sm:$0xff]
    %v1026 = vld [vmem:[%s4 + $0x8] sm:$0xff]
    %v1027 = vld [vmem:[%s4 + $0x10] sm:$0xff]
    %v1028 = vld [vmem:[%s4 + $0x18] sm:$0xff]
    %v1029 = vld [vmem:[%s6] sm:$0x1]
    %v1031 = vlaneseq
    %v1032 = vshrl.u32 %v1031, 7
    %v1033 = vsub.s32 0, %v1032
    %v1034 = vrot.slane %v1029, %v1033
    %v1037 = vsel %vm206, %v1017, 0
    %v1040 = vsel %vm206, %v1018, 0
    %v1043 = vsel %vm206, %v1019, 0
    %v1046 = vsel %vm206, %v1020, 0
    %v1049 = vsel %vm206, %v1021, 0
    %v1052 = vsel %vm206, %v1022, 0
    %v1055 = vsel %vm206, %v1023, 0
    %v1058 = vsel %vm206, %v1024, 0
    %1060 = vmatprep.subr.mxu0 0.0
    %1061 = vmatpush1.msra.mxu0 0.0
    %1062 = vmatprep.subr.mxu0 0.0
    %1063 = vmatpush1.msra.mxu0 0.0
    %1064 = vmatprep.subr.mxu0 0.0
    %1065 = vmatpush1.msra.mxu0 0.0
    %1066 = vmatprep.subr.mxu0 0.0
    %1067 = vmatpush1.msra.mxu0 0.0
    %1068 = vmatprep.subr.mxu0 0.0
    %1069 = vmatpush1.msra.mxu0 0.0
    %1070 = vmatprep.subr.mxu0 0.0
    %1071 = vmatpush1.msra.mxu0 0.0
    %1072 = vmatprep.subr.mxu0 0.0
    %1073 = vmatpush1.msra.mxu0 0.0
    %1074 = vmatprep.subr.mxu0 0.0
    %1075 = vmatpush1.msra.mxu0 0.0
    %1076 = vmatprep.subr.mxu0 0.0
    %1077 = vmatpush1.msra.mxu0 0.0
    %1078 = vmatprep.subr.mxu0 0.0
    %1079 = vmatpush1.msra.mxu0 0.0
    %1080 = vmatprep.subr.mxu0 0.0
    %1081 = vmatpush1.msra.mxu0 0.0
    %1082 = vmatprep.subr.mxu0 0.0
    %1083 = vmatpush1.msra.mxu0 0.0
    %1084 = vmatprep.subr.mxu0 0.0
    %1085 = vmatpush1.msra.mxu0 %v1028
    %1086 = vmatprep.subr.mxu0 0.0
    %1087 = vmatpush1.msra.mxu0 %v1027
    %1088 = vmatprep.subr.mxu0 0.0
    %1089 = vmatpush1.msra.mxu0 %v1026
    %1090 = vmatprep.subr.mxu0 0.0
    %1091 = vmatpush1.msra.mxu0 %v1025
    %1092 = vmatprep.subr.mxu0 0.0
    %1093 = vmatpush2.msra.mxu0 0.0
    %1094 = vmatprep.subr.mxu0 0.0
    %1095 = vmatpush2.msra.mxu0 0.0
    %1096 = vmatprep.subr.mxu0 0.0
    %1097 = vmatpush2.msra.mxu0 0.0
    %1098 = vmatprep.subr.mxu0 0.0
    %1099 = vmatpush2.msra.mxu0 0.0
    %1100 = vmatprep.subr.mxu0 0.0
    %1101 = vmatpush2.msra.mxu0 0.0
    %1102 = vmatprep.subr.mxu0 0.0
    %1103 = vmatpush2.msra.mxu0 0.0
    %1104 = vmatprep.subr.mxu0 0.0
    %1105 = vmatpush2.msra.mxu0 0.0
    %1106 = vmatprep.subr.mxu0 0.0
    %1107 = vmatpush2.msra.mxu0 0.0
    %1108 = vmatprep.subr.mxu0 0.0
    %1109 = vmatpush2.msra.mxu0 0.0
    %1110 = vmatprep.subr.mxu0 0.0
    %1111 = vmatpush2.msra.mxu0 0.0
    %1112 = vmatprep.subr.mxu0 0.0
    %1113 = vmatpush2.msra.mxu0 0.0
    %1114 = vmatprep.subr.mxu0 0.0
    %1115 = vmatpush2.msra.mxu0 0.0
    %1116 = vmatprep.subr.mxu0 0.0
    %1117 = vmatpush2.msra.mxu0 0.0
    %1118 = vmatprep.subr.mxu0 0.0
    %1119 = vmatpush2.msra.mxu0 0.0
    %1120 = vmatprep.subr.mxu0 0.0
    %1121 = vmatpush2.msra.mxu0 0.0
    %1122 = vmatprep.subr.mxu0 0.0
    %1123 = vmatpush2.msra.mxu0 0.0
    %1124 = vmatprep.mubr.f32.mxu0 0.0
    %1125 = vmatmul.mubr.f32.gmra.mxu0 %v1037
    %v1126 = vpop.f32.mrf.mxu0
    %v1127 = vadd.f32 %v1034, %v1126
    %v1128 = vpop.f32.mrf.mxu0
    %1129 = vmatprep.mubr.f32.mxu0 0.0
    %1130 = vmatmul.mubr.f32.gmra.mxu0 %v1040
    %v1131 = vpop.f32.mrf.mxu0
    %v1132 = vadd.f32 %v1034, %v1131
    %v1133 = vpop.f32.mrf.mxu0
    %1134 = vmatprep.mubr.f32.mxu0 0.0
    %1135 = vmatmul.mubr.f32.gmra.mxu0 %v1043
    %v1136 = vpop.f32.mrf.mxu0
    %v1137 = vadd.f32 %v1034, %v1136
    %v1138 = vpop.f32.mrf.mxu0
    %1139 = vmatprep.mubr.f32.mxu0 0.0
    %1140 = vmatmul.mubr.f32.gmra.mxu0 %v1046
    %v1141 = vpop.f32.mrf.mxu0
    %v1142 = vadd.f32 %v1034, %v1141
    %v1143 = vpop.f32.mrf.mxu0
    %1144 = vmatprep.mubr.f32.mxu0 0.0
    %1145 = vmatmul.mubr.f32.gmra.mxu0 %v1049
    %v1146 = vpop.f32.mrf.mxu0
    %v1147 = vadd.f32 %v1034, %v1146
    %v1148 = vpop.f32.mrf.mxu0
    %1149 = vmatprep.mubr.f32.mxu0 0.0
    %1150 = vmatmul.mubr.f32.gmra.mxu0 %v1052
    %v1151 = vpop.f32.mrf.mxu0
    %v1152 = vadd.f32 %v1034, %v1151
    %v1153 = vpop.f32.mrf.mxu0
    %1154 = vmatprep.mubr.f32.mxu0 0.0
    %1155 = vmatmul.mubr.f32.gmra.mxu0 %v1055
    %v1156 = vpop.f32.mrf.mxu0
    %v1157 = vadd.f32 %v1034, %v1156
    %v1158 = vpop.f32.mrf.mxu0
    %1159 = vmatprep.mubr.f32.mxu0 0.0
    %1160 = vmatmul.mubr.f32.gmra.mxu0 %v1058
    %v1161 = vpop.f32.mrf.mxu0
    %v1162 = vadd.f32 %v1034, %v1161
    %v1163 = vpop.f32.mrf.mxu0
    %1164 = vdwg.mxu0
    %1165 = vst [vmem:[#allocation3] sm:$0xff] %v1127
    %1166 = vst [vmem:[#allocation3 + $0x8] sm:$0xff] %v1132
    %1167 = vst [vmem:[#allocation3 + $0x10] sm:$0xff] %v1137
    %1168 = vst [vmem:[#allocation3 + $0x18] sm:$0xff] %v1142
    %1169 = vst [vmem:[#allocation3 + $0x20] sm:$0xff] %v1147
    %1170 = vst [vmem:[#allocation3 + $0x28] sm:$0xff] %v1152
    %1171 = vst [vmem:[#allocation3 + $0x30] sm:$0xff] %v1157
    %1172 = vst [vmem:[#allocation3 + $0x38] sm:$0xff] %v1162
    %v1173 = vld [vmem:[#allocation3] sm:$0xff]
    %1174 = vmatprep.subr.mxu0 0.0
    %1175 = vmatpush1.msra.mxu0 0.0
    %1176 = vmatprep.subr.mxu0 0.0
    %1177 = vmatpush1.msra.mxu0 0.0
    %1178 = vmatprep.subr.mxu0 0.0
    %1179 = vmatpush1.msra.mxu0 0.0
    %1180 = vmatprep.subr.mxu0 0.0
    %1181 = vmatpush1.msra.mxu0 0.0
    %1182 = vmatprep.subr.mxu0 0.0
    %1183 = vmatpush1.msra.mxu0 0.0
    %1184 = vmatprep.subr.mxu0 0.0
    %1185 = vmatpush1.msra.mxu0 0.0
    %1186 = vmatprep.subr.mxu0 0.0
    %1187 = vmatpush1.msra.mxu0 0.0
    %1188 = vmatprep.subr.mxu0 0.0
    %1189 = vmatpush1.msra.mxu0 0.0
    %1190 = vmatprep.subr.mxu0 0.0
    %1191 = vmatpush1.msra.mxu0 0.0
    %1192 = vmatprep.subr.mxu0 0.0
    %1193 = vmatpush1.msra.mxu0 0.0
    %1194 = vmatprep.subr.mxu0 0.0
    %1195 = vmatpush1.msra.mxu0 0.0
    %1196 = vmatprep.subr.mxu0 0.0
    %1197 = vmatpush1.msra.mxu0 0.0
    %1198 = vmatprep.subr.mxu0 0.0
    %1199 = vmatpush1.msra.mxu0 %v1016
    %1200 = vmatprep.subr.mxu0 0.0
    %1201 = vmatpush1.msra.mxu0 %v1015
    %1202 = vmatprep.subr.mxu0 0.0
    %1203 = vmatpush1.msra.mxu0 %v1014
    %1204 = vmatprep.subr.mxu0 0.0
    %1205 = vmatpush1.msra.mxu0 %v1013
    %1206 = vmatprep.subr.mxu0 0.0
    %1207 = vmatpush2.msra.mxu0 0.0
    %1208 = vmatprep.subr.mxu0 0.0
    %1209 = vmatpush2.msra.mxu0 0.0
    %1210 = vmatprep.subr.mxu0 0.0
    %1211 = vmatpush2.msra.mxu0 0.0
    %1212 = vmatprep.subr.mxu0 0.0
    %1213 = vmatpush2.msra.mxu0 0.0
    %1214 = vmatprep.subr.mxu0 0.0
    %1215 = vmatpush2.msra.mxu0 0.0
    %1216 = vmatprep.subr.mxu0 0.0
    %1217 = vmatpush2.msra.mxu0 0.0
    %1218 = vmatprep.subr.mxu0 0.0
    %1219 = vmatpush2.msra.mxu0 0.0
    %1220 = vmatprep.subr.mxu0 0.0
    %1221 = vmatpush2.msra.mxu0 0.0
    %1222 = vmatprep.subr.mxu0 0.0
    %1223 = vmatpush2.msra.mxu0 0.0
    %1224 = vmatprep.subr.mxu0 0.0
    %1225 = vmatpush2.msra.mxu0 0.0
    %1226 = vmatprep.subr.mxu0 0.0
    %1227 = vmatpush2.msra.mxu0 0.0
    %1228 = vmatprep.subr.mxu0 0.0
    %1229 = vmatpush2.msra.mxu0 0.0
    %1230 = vmatprep.subr.mxu0 0.0
    %1231 = vmatpush2.msra.mxu0 0.0
    %1232 = vmatprep.subr.mxu0 0.0
    %1233 = vmatpush2.msra.mxu0 0.0
    %1234 = vmatprep.subr.mxu0 0.0
    %1235 = vmatpush2.msra.mxu0 0.0
    %1236 = vmatprep.subr.mxu0 0.0
    %1237 = vmatpush2.msra.mxu0 0.0
    %1238 = vmatprep.mubr.f32.mxu0 0.0
    %1239 = vmatmul.mubr.f32.gmra.mxu0 %v208
    %v1240 = vpop.f32.mrf.mxu0
    %v1241 = vadd.f32 0.0, %v1240
    %v1242 = vpop.f32.mrf.mxu0
    %1243 = vdwg.mxu0
    %v1244 = vadd.f32 %v1173, %v1241
    %v1245 = vtanh.pop %v1244
    %v1246 = vmul.f32 %v1245, 0.5
    %v1247 = vadd.f32 %v1246, 0.5
    %v1248 = vmul.f32 %v1247, 0.0
    %1250 = vrot.lane.b32.xlu0 %v1245, 32
    %v1251 = vpop.permute.xlu0 %1250
    %v1253 = vmul.f32 %v1247, %v1251
    %1255 = vrot.lane.b32.xlu0 %v1253, 32
    %v1256 = vpop.permute.xlu0 %1255
    %v1258 = vadd.f32 %v1248, %v1256
    %v1259 = vtanh.pop %v1258
    %1261 = vrot.lane.b32.xlu0 %v1259, 32
    %v1262 = vpop.permute.xlu0 %1261
    %v1264 = vmul.f32 %v1247, %v1262
    %v1265 = vld [vmem:[%s306] sm:$0xff]
    %1267 = vrot.lane.b32.xlu0 %v1264, 64
    %v1268 = vpop.permute.xlu0 %1267
    %v1269 = vsel %vm206, %v1268, 0
    %1271 = vmatprep.subr.mxu0 0.0
    %1272 = vmatpush1.msra.mxu0 0.0
    %1273 = vmatprep.subr.mxu0 0.0
    %1274 = vmatpush1.msra.mxu0 0.0
    %1275 = vmatprep.subr.mxu0 0.0
    %1276 = vmatpush1.msra.mxu0 0.0
    %1277 = vmatprep.subr.mxu0 0.0
    %1278 = vmatpush1.msra.mxu0 0.0
    %1279 = vmatprep.subr.mxu0 0.0
    %1280 = vmatpush1.msra.mxu0 0.0
    %1281 = vmatprep.subr.mxu0 0.0
    %1282 = vmatpush1.msra.mxu0 0.0
    %1283 = vmatprep.subr.mxu0 0.0
    %1284 = vmatpush1.msra.mxu0 0.0
    %1285 = vmatprep.subr.mxu0 0.0
    %1286 = vmatpush1.msra.mxu0 0.0
    %1287 = vmatprep.subr.mxu0 0.0
    %1288 = vmatpush1.msra.mxu0 0.0
    %1289 = vmatprep.subr.mxu0 0.0
    %1290 = vmatpush1.msra.mxu0 0.0
    %1291 = vmatprep.subr.mxu0 0.0
    %1292 = vmatpush1.msra.mxu0 0.0
    %1293 = vmatprep.subr.mxu0 0.0
    %1294 = vmatpush1.msra.mxu0 0.0
    %1295 = vmatprep.subr.mxu0 0.0
    %1296 = vmatpush1.msra.mxu0 %v1016
    %1297 = vmatprep.subr.mxu0 0.0
    %1298 = vmatpush1.msra.mxu0 %v1015
    %1299 = vmatprep.subr.mxu0 0.0
    %1300 = vmatpush1.msra.mxu0 %v1014
    %1301 = vmatprep.subr.mxu0 0.0
    %1302 = vmatpush1.msra.mxu0 %v1013
    %1303 = vmatprep.subr.mxu0 0.0
    %1304 = vmatpush2.msra.mxu0 0.0
    %1305 = vmatprep.subr.mxu0 0.0
    %1306 = vmatpush2.msra.mxu0 0.0
    %1307 = vmatprep.subr.mxu0 0.0
    %1308 = vmatpush2.msra.mxu0 0.0
    %1309 = vmatprep.subr.mxu0 0.0
    %1310 = vmatpush2.msra.mxu0 0.0
    %1311 = vmatprep.subr.mxu0 0.0
    %1312 = vmatpush2.msra.mxu0 0.0
    %1313 = vmatprep.subr.mxu0 0.0
    %1314 = vmatpush2.msra.mxu0 0.0
    %1315 = vmatprep.subr.mxu0 0.0
    %1316 = vmatpush2.msra.mxu0 0.0
    %1317 = vmatprep.subr.mxu0 0.0
    %1318 = vmatpush2.msra.mxu0 0.0
    %1319 = vmatprep.subr.mxu0 0.0
    %1320 = vmatpush2.msra.mxu0 0.0
    %1321 = vmatprep.subr.mxu0 0.0
    %1322 = vmatpush2.msra.mxu0 0.0
    %1323 = vmatprep.subr.mxu0 0.0
    %1324 = vmatpush2.msra.mxu0 0.0
    %1325 = vmatprep.subr.mxu0 0.0
    %1326 = vmatpush2.msra.mxu0 0.0
    %1327 = vmatprep.subr.mxu0 0.0
    %1328 = vmatpush2.msra.mxu0 0.0
    %1329 = vmatprep.subr.mxu0 0.0
    %1330 = vmatpush2.msra.mxu0 0.0
    %1331 = vmatprep.subr.mxu0 0.0
    %1332 = vmatpush2.msra.mxu0 0.0
    %1333 = vmatprep.subr.mxu0 0.0
    %1334 = vmatpush2.msra.mxu0 0.0
    %1335 = vmatprep.mubr.f32.mxu0 0.0
    %1336 = vmatmul.mubr.f32.gmra.mxu0 %v1269
    %v1337 = vpop.f32.mrf.mxu0
    %v1338 = vadd.f32 0.0, %v1337
    %v1339 = vpop.f32.mrf.mxu0
    %1340 = vdwg.mxu0
    %v1341 = vadd.f32 %v1265, %v1338
    %v1342 = vtanh.pop %v1341
    %v1343 = vmul.f32 %v1342, 0.5
    %v1344 = vadd.f32 %v1343, 0.5
    %v1345 = vmul.f32 %v1344, %v1258
    %1347 = vrot.lane.b32.xlu0 %v1342, 32
    %v1348 = vpop.permute.xlu0 %1347
    %v1350 = vmul.f32 %v1344, %v1348
    %1352 = vrot.lane.b32.xlu0 %v1350, 32
    %v1353 = vpop.permute.xlu0 %1352
    %v1355 = vadd.f32 %v1345, %v1353
    %v1356 = vtanh.pop %v1355
    %1358 = vrot.lane.b32.xlu0 %v1356, 32
    %v1359 = vpop.permute.xlu0 %1358
    %v1361 = vmul.f32 %v1344, %v1359
    %v1362 = vld [vmem:[%s407] sm:$0xff]
    %1364 = vrot.lane.b32.xlu0 %v1361, 64
    %v1365 = vpop.permute.xlu0 %1364
    %v1366 = vsel %vm206, %v1365, 0
    %1368 = vmatprep.subr.mxu0 0.0
    %1369 = vmatpush1.msra.mxu0 0.0
    %1370 = vmatprep.subr.mxu0 0.0
    %1371 = vmatpush1.msra.mxu0 0.0
    %1372 = vmatprep.subr.mxu0 0.0
    %1373 = vmatpush1.msra.mxu0 0.0
    %1374 = vmatprep.subr.mxu0 0.0
    %1375 = vmatpush1.msra.mxu0 0.0
    %1376 = vmatprep.subr.mxu0 0.0
    %1377 = vmatpush1.msra.mxu0 0.0
    %1378 = vmatprep.subr.mxu0 0.0
    %1379 = vmatpush1.msra.mxu0 0.0
    %1380 = vmatprep.subr.mxu0 0.0
    %1381 = vmatpush1.msra.mxu0 0.0
    %1382 = vmatprep.subr.mxu0 0.0
    %1383 = vmatpush1.msra.mxu0 0.0
    %1384 = vmatprep.subr.mxu0 0.0
    %1385 = vmatpush1.msra.mxu0 0.0
    %1386 = vmatprep.subr.mxu0 0.0
    %1387 = vmatpush1.msra.mxu0 0.0
    %1388 = vmatprep.subr.mxu0 0.0
    %1389 = vmatpush1.msra.mxu0 0.0
    %1390 = vmatprep.subr.mxu0 0.0
    %1391 = vmatpush1.msra.mxu0 0.0
    %1392 = vmatprep.subr.mxu0 0.0
    %1393 = vmatpush1.msra.mxu0 %v1016
    %1394 = vmatprep.subr.mxu0 0.0
    %1395 = vmatpush1.msra.mxu0 %v1015
    %1396 = vmatprep.subr.mxu0 0.0
    %1397 = vmatpush1.msra.mxu0 %v1014
    %1398 = vmatprep.subr.mxu0 0.0
    %1399 = vmatpush1.msra.mxu0 %v1013
    %1400 = vmatprep.subr.mxu0 0.0
    %1401 = vmatpush2.msra.mxu0 0.0
    %1402 = vmatprep.subr.mxu0 0.0
    %1403 = vmatpush2.msra.mxu0 0.0
    %1404 = vmatprep.subr.mxu0 0.0
    %1405 = vmatpush2.msra.mxu0 0.0
    %1406 = vmatprep.subr.mxu0 0.0
    %1407 = vmatpush2.msra.mxu0 0.0
    %1408 = vmatprep.subr.mxu0 0.0
    %1409 = vmatpush2.msra.mxu0 0.0
    %1410 = vmatprep.subr.mxu0 0.0
    %1411 = vmatpush2.msra.mxu0 0.0
    %1412 = vmatprep.subr.mxu0 0.0
    %1413 = vmatpush2.msra.mxu0 0.0
    %1414 = vmatprep.subr.mxu0 0.0
    %1415 = vmatpush2.msra.mxu0 0.0
    %1416 = vmatprep.subr.mxu0 0.0
    %1417 = vmatpush2.msra.mxu0 0.0
    %1418 = vmatprep.subr.mxu0 0.0
    %1419 = vmatpush2.msra.mxu0 0.0
    %1420 = vmatprep.subr.mxu0 0.0
    %1421 = vmatpush2.msra.mxu0 0.0
    %1422 = vmatprep.subr.mxu0 0.0
    %1423 = vmatpush2.msra.mxu0 0.0
    %1424 = vmatprep.subr.mxu0 0.0
    %1425 = vmatpush2.msra.mxu0 0.0
    %1426 = vmatprep.subr.mxu0 0.0
    %1427 = vmatpush2.msra.mxu0 0.0
    %1428 = vmatprep.subr.mxu0 0.0
    %1429 = vmatpush2.msra.mxu0 0.0
    %1430 = vmatprep.subr.mxu0 0.0
    %1431 = vmatpush2.msra.mxu0 0.0
    %1432 = vmatprep.mubr.f32.mxu0 0.0
    %1433 = vmatmul.mubr.f32.gmra.mxu0 %v1366
    %v1434 = vpop.f32.mrf.mxu0
    %v1435 = vadd.f32 0.0, %v1434
    %v1436 = vpop.f32.mrf.mxu0
    %1437 = vdwg.mxu0
    %v1438 = vadd.f32 %v1362, %v1435
    %v1439 = vtanh.pop %v1438
    %v1440 = vmul.f32 %v1439, 0.5
    %v1441 = vadd.f32 %v1440, 0.5
    %v1442 = vmul.f32 %v1441, %v1355
    %1444 = vrot.lane.b32.xlu0 %v1439, 32
    %v1445 = vpop.permute.xlu0 %1444
    %v1447 = vmul.f32 %v1441, %v1445
    %1449 = vrot.lane.b32.xlu0 %v1447, 32
    %v1450 = vpop.permute.xlu0 %1449
    %v1452 = vadd.f32 %v1442, %v1450
    %v1453 = vtanh.pop %v1452
    %1455 = vrot.lane.b32.xlu0 %v1453, 32
    %v1456 = vpop.permute.xlu0 %1455
    %v1458 = vmul.f32 %v1441, %v1456
    %v1459 = vld [vmem:[%s508] sm:$0xff]
    %1461 = vrot.lane.b32.xlu0 %v1458, 64
    %v1462 = vpop.permute.xlu0 %1461
    %v1463 = vsel %vm206, %v1462, 0
    %1465 = vmatprep.subr.mxu0 0.0
    %1466 = vmatpush1.msra.mxu0 0.0
    %1467 = vmatprep.subr.mxu0 0.0
    %1468 = vmatpush1.msra.mxu0 0.0
    %1469 = vmatprep.subr.mxu0 0.0
    %1470 = vmatpush1.msra.mxu0 0.0
    %1471 = vmatprep.subr.mxu0 0.0
    %1472 = vmatpush1.msra.mxu0 0.0
    %1473 = vmatprep.subr.mxu0 0.0
    %1474 = vmatpush1.msra.mxu0 0.0
    %1475 = vmatprep.subr.mxu0 0.0
    %1476 = vmatpush1.msra.mxu0 0.0
    %1477 = vmatprep.subr.mxu0 0.0
    %1478 = vmatpush1.msra.mxu0 0.0
    %1479 = vmatprep.subr.mxu0 0.0
    %1480 = vmatpush1.msra.mxu0 0.0
    %1481 = vmatprep.subr.mxu0 0.0
    %1482 = vmatpush1.msra.mxu0 0.0
    %1483 = vmatprep.subr.mxu0 0.0
    %1484 = vmatpush1.msra.mxu0 0.0
    %1485 = vmatprep.subr.mxu0 0.0
    %1486 = vmatpush1.msra.mxu0 0.0
    %1487 = vmatprep.subr.mxu0 0.0
    %1488 = vmatpush1.msra.mxu0 0.0
    %1489 = vmatprep.subr.mxu0 0.0
    %1490 = vmatpush1.msra.mxu0 %v1016
    %1491 = vmatprep.subr.mxu0 0.0
    %1492 = vmatpush1.msra.mxu0 %v1015
    %1493 = vmatprep.subr.mxu0 0.0
    %1494 = vmatpush1.msra.mxu0 %v1014
    %1495 = vmatprep.subr.mxu0 0.0
    %1496 = vmatpush1.msra.mxu0 %v1013
    %1497 = vmatprep.subr.mxu0 0.0
    %1498 = vmatpush2.msra.mxu0 0.0
    %1499 = vmatprep.subr.mxu0 0.0
    %1500 = vmatpush2.msra.mxu0 0.0
    %1501 = vmatprep.subr.mxu0 0.0
    %1502 = vmatpush2.msra.mxu0 0.0
    %1503 = vmatprep.subr.mxu0 0.0
    %1504 = vmatpush2.msra.mxu0 0.0
    %1505 = vmatprep.subr.mxu0 0.0
    %1506 = vmatpush2.msra.mxu0 0.0
    %1507 = vmatprep.subr.mxu0 0.0
    %1508 = vmatpush2.msra.mxu0 0.0
    %1509 = vmatprep.subr.mxu0 0.0
    %1510 = vmatpush2.msra.mxu0 0.0
    %1511 = vmatprep.subr.mxu0 0.0
    %1512 = vmatpush2.msra.mxu0 0.0
    %1513 = vmatprep.subr.mxu0 0.0
    %1514 = vmatpush2.msra.mxu0 0.0
    %1515 = vmatprep.subr.mxu0 0.0
    %1516 = vmatpush2.msra.mxu0 0.0
    %1517 = vmatprep.subr.mxu0 0.0
    %1518 = vmatpush2.msra.mxu0 0.0
    %1519 = vmatprep.subr.mxu0 0.0
    %1520 = vmatpush2.msra.mxu0 0.0
    %1521 = vmatprep.subr.mxu0 0.0
    %1522 = vmatpush2.msra.mxu0 0.0
    %1523 = vmatprep.subr.mxu0 0.0
    %1524 = vmatpush2.msra.mxu0 0.0
    %1525 = vmatprep.subr.mxu0 0.0
    %1526 = vmatpush2.msra.mxu0 0.0
    %1527 = vmatprep.subr.mxu0 0.0
    %1528 = vmatpush2.msra.mxu0 0.0
    %1529 = vmatprep.mubr.f32.mxu0 0.0
    %1530 = vmatmul.mubr.f32.gmra.mxu0 %v1463
    %v1531 = vpop.f32.mrf.mxu0
    %v1532 = vadd.f32 0.0, %v1531
    %v1533 = vpop.f32.mrf.mxu0
    %1534 = vdwg.mxu0
    %v1535 = vadd.f32 %v1459, %v1532
    %v1536 = vtanh.pop %v1535
    %v1537 = vmul.f32 %v1536, 0.5
    %v1538 = vadd.f32 %v1537, 0.5
    %v1539 = vmul.f32 %v1538, %v1452
    %1541 = vrot.lane.b32.xlu0 %v1536, 32
    %v1542 = vpop.permute.xlu0 %1541
    %v1544 = vmul.f32 %v1538, %v1542
    %1546 = vrot.lane.b32.xlu0 %v1544, 32
    %v1547 = vpop.permute.xlu0 %1546
    %v1549 = vadd.f32 %v1539, %v1547
    %v1550 = vtanh.pop %v1549
    %1552 = vrot.lane.b32.xlu0 %v1550, 32
    %v1553 = vpop.permute.xlu0 %1552
    %v1555 = vmul.f32 %v1538, %v1553
    %v1556 = vld [vmem:[%s609] sm:$0xff]
    %1558 = vrot.lane.b32.xlu0 %v1555, 64
    %v1559 = vpop.permute.xlu0 %1558
    %v1560 = vsel %vm206, %v1559, 0
    %1562 = vmatprep.subr.mxu0 0.0
    %1563 = vmatpush1.msra.mxu0 0.0
    %1564 = vmatprep.subr.mxu0 0.0
    %1565 = vmatpush1.msra.mxu0 0.0
    %1566 = vmatprep.subr.mxu0 0.0
    %1567 = vmatpush1.msra.mxu0 0.0
    %1568 = vmatprep.subr.mxu0 0.0
    %1569 = vmatpush1.msra.mxu0 0.0
    %1570 = vmatprep.subr.mxu0 0.0
    %1571 = vmatpush1.msra.mxu0 0.0
    %1572 = vmatprep.subr.mxu0 0.0
    %1573 = vmatpush1.msra.mxu0 0.0
    %1574 = vmatprep.subr.mxu0 0.0
    %1575 = vmatpush1.msra.mxu0 0.0
    %1576 = vmatprep.subr.mxu0 0.0
    %1577 = vmatpush1.msra.mxu0 0.0
    %1578 = vmatprep.subr.mxu0 0.0
    %1579 = vmatpush1.msra.mxu0 0.0
    %1580 = vmatprep.subr.mxu0 0.0
    %1581 = vmatpush1.msra.mxu0 0.0
    %1582 = vmatprep.subr.mxu0 0.0
    %1583 = vmatpush1.msra.mxu0 0.0
    %1584 = vmatprep.subr.mxu0 0.0
    %1585 = vmatpush1.msra.mxu0 0.0
    %1586 = vmatprep.subr.mxu0 0.0
    %1587 = vmatpush1.msra.mxu0 %v1016
    %1588 = vmatprep.subr.mxu0 0.0
    %1589 = vmatpush1.msra.mxu0 %v1015
    %1590 = vmatprep.subr.mxu0 0.0
    %1591 = vmatpush1.msra.mxu0 %v1014
    %1592 = vmatprep.subr.mxu0 0.0
    %1593 = vmatpush1.msra.mxu0 %v1013
    %1594 = vmatprep.subr.mxu0 0.0
    %1595 = vmatpush2.msra.mxu0 0.0
    %1596 = vmatprep.subr.mxu0 0.0
    %1597 = vmatpush2.msra.mxu0 0.0
    %1598 = vmatprep.subr.mxu0 0.0
    %1599 = vmatpush2.msra.mxu0 0.0
    %1600 = vmatprep.subr.mxu0 0.0
    %1601 = vmatpush2.msra.mxu0 0.0
    %1602 = vmatprep.subr.mxu0 0.0
    %1603 = vmatpush2.msra.mxu0 0.0
    %1604 = vmatprep.subr.mxu0 0.0
    %1605 = vmatpush2.msra.mxu0 0.0
    %1606 = vmatprep.subr.mxu0 0.0
    %1607 = vmatpush2.msra.mxu0 0.0
    %1608 = vmatprep.subr.mxu0 0.0
    %1609 = vmatpush2.msra.mxu0 0.0
    %1610 = vmatprep.subr.mxu0 0.0
    %1611 = vmatpush2.msra.mxu0 0.0
    %1612 = vmatprep.subr.mxu0 0.0
    %1613 = vmatpush2.msra.mxu0 0.0
    %1614 = vmatprep.subr.mxu0 0.0
    %1615 = vmatpush2.msra.mxu0 0.0
    %1616 = vmatprep.subr.mxu0 0.0
    %1617 = vmatpush2.msra.mxu0 0.0
    %1618 = vmatprep.subr.mxu0 0.0
    %1619 = vmatpush2.msra.mxu0 0.0
    %1620 = vmatprep.subr.mxu0 0.0
    %1621 = vmatpush2.msra.mxu0 0.0
    %1622 = vmatprep.subr.mxu0 0.0
    %1623 = vmatpush2.msra.mxu0 0.0
    %1624 = vmatprep.subr.mxu0 0.0
    %1625 = vmatpush2.msra.mxu0 0.0
    %1626 = vmatprep.mubr.f32.mxu0 0.0
    %1627 = vmatmul.mubr.f32.gmra.mxu0 %v1560
    %v1628 = vpop.f32.mrf.mxu0
    %v1629 = vadd.f32 0.0, %v1628
    %v1630 = vpop.f32.mrf.mxu0
    %1631 = vdwg.mxu0
    %v1632 = vadd.f32 %v1556, %v1629
    %v1633 = vtanh.pop %v1632
    %v1634 = vmul.f32 %v1633, 0.5
    %v1635 = vadd.f32 %v1634, 0.5
    %v1636 = vmul.f32 %v1635, %v1549
    %1638 = vrot.lane.b32.xlu0 %v1633, 32
    %v1639 = vpop.permute.xlu0 %1638
    %v1641 = vmul.f32 %v1635, %v1639
    %1643 = vrot.lane.b32.xlu0 %v1641, 32
    %v1644 = vpop.permute.xlu0 %1643
    %v1646 = vadd.f32 %v1636, %v1644
    %v1647 = vtanh.pop %v1646
    %1649 = vrot.lane.b32.xlu0 %v1647, 32
    %v1650 = vpop.permute.xlu0 %1649
    %v1652 = vmul.f32 %v1635, %v1650
    %v1653 = vld [vmem:[%s710] sm:$0xff]
    %1655 = vrot.lane.b32.xlu0 %v1652, 64
    %v1656 = vpop.permute.xlu0 %1655
    %v1657 = vsel %vm206, %v1656, 0
    %1659 = vmatprep.subr.mxu0 0.0
    %1660 = vmatpush1.msra.mxu0 0.0
    %1661 = vmatprep.subr.mxu0 0.0
    %1662 = vmatpush1.msra.mxu0 0.0
    %1663 = vmatprep.subr.mxu0 0.0
    %1664 = vmatpush1.msra.mxu0 0.0
    %1665 = vmatprep.subr.mxu0 0.0
    %1666 = vmatpush1.msra.mxu0 0.0
    %1667 = vmatprep.subr.mxu0 0.0
    %1668 = vmatpush1.msra.mxu0 0.0
    %1669 = vmatprep.subr.mxu0 0.0
    %1670 = vmatpush1.msra.mxu0 0.0
    %1671 = vmatprep.subr.mxu0 0.0
    %1672 = vmatpush1.msra.mxu0 0.0
    %1673 = vmatprep.subr.mxu0 0.0
    %1674 = vmatpush1.msra.mxu0 0.0
    %1675 = vmatprep.subr.mxu0 0.0
    %1676 = vmatpush1.msra.mxu0 0.0
    %1677 = vmatprep.subr.mxu0 0.0
    %1678 = vmatpush1.msra.mxu0 0.0
    %1679 = vmatprep.subr.mxu0 0.0
    %1680 = vmatpush1.msra.mxu0 0.0
    %1681 = vmatprep.subr.mxu0 0.0
    %1682 = vmatpush1.msra.mxu0 0.0
    %1683 = vmatprep.subr.mxu0 0.0
    %1684 = vmatpush1.msra.mxu0 %v1016
    %1685 = vmatprep.subr.mxu0 0.0
    %1686 = vmatpush1.msra.mxu0 %v1015
    %1687 = vmatprep.subr.mxu0 0.0
    %1688 = vmatpush1.msra.mxu0 %v1014
    %1689 = vmatprep.subr.mxu0 0.0
    %1690 = vmatpush1.msra.mxu0 %v1013
    %1691 = vmatprep.subr.mxu0 0.0
    %1692 = vmatpush2.msra.mxu0 0.0
    %1693 = vmatprep.subr.mxu0 0.0
    %1694 = vmatpush2.msra.mxu0 0.0
    %1695 = vmatprep.subr.mxu0 0.0
    %1696 = vmatpush2.msra.mxu0 0.0
    %1697 = vmatprep.subr.mxu0 0.0
    %1698 = vmatpush2.msra.mxu0 0.0
    %1699 = vmatprep.subr.mxu0 0.0
    %1700 = vmatpush2.msra.mxu0 0.0
    %1701 = vmatprep.subr.mxu0 0.0
    %1702 = vmatpush2.msra.mxu0 0.0
    %1703 = vmatprep.subr.mxu0 0.0
    %1704 = vmatpush2.msra.mxu0 0.0
    %1705 = vmatprep.subr.mxu0 0.0
    %1706 = vmatpush2.msra.mxu0 0.0
    %1707 = vmatprep.subr.mxu0 0.0
    %1708 = vmatpush2.msra.mxu0 0.0
    %1709 = vmatprep.subr.mxu0 0.0
    %1710 = vmatpush2.msra.mxu0 0.0
    %1711 = vmatprep.subr.mxu0 0.0
    %1712 = vmatpush2.msra.mxu0 0.0
    %1713 = vmatprep.subr.mxu0 0.0
    %1714 = vmatpush2.msra.mxu0 0.0
    %1715 = vmatprep.subr.mxu0 0.0
    %1716 = vmatpush2.msra.mxu0 0.0
    %1717 = vmatprep.subr.mxu0 0.0
    %1718 = vmatpush2.msra.mxu0 0.0
    %1719 = vmatprep.subr.mxu0 0.0
    %1720 = vmatpush2.msra.mxu0 0.0
    %1721 = vmatprep.subr.mxu0 0.0
    %1722 = vmatpush2.msra.mxu0 0.0
    %1723 = vmatprep.mubr.f32.mxu0 0.0
    %1724 = vmatmul.mubr.f32.gmra.mxu0 %v1657
    %v1725 = vpop.f32.mrf.mxu0
    %v1726 = vadd.f32 0.0, %v1725
    %v1727 = vpop.f32.mrf.mxu0
    %1728 = vdwg.mxu0
    %v1729 = vadd.f32 %v1653, %v1726
    %v1730 = vtanh.pop %v1729
    %v1731 = vmul.f32 %v1730, 0.5
    %v1732 = vadd.f32 %v1731, 0.5
    %v1733 = vmul.f32 %v1732, %v1646
    %1735 = vrot.lane.b32.xlu0 %v1730, 32
    %v1736 = vpop.permute.xlu0 %1735
    %v1738 = vmul.f32 %v1732, %v1736
    %1740 = vrot.lane.b32.xlu0 %v1738, 32
    %v1741 = vpop.permute.xlu0 %1740
    %v1743 = vadd.f32 %v1733, %v1741
    %v1744 = vtanh.pop %v1743
    %1746 = vrot.lane.b32.xlu0 %v1744, 32
    %v1747 = vpop.permute.xlu0 %1746
    %v1749 = vmul.f32 %v1732, %v1747
    %v1750 = vld [vmem:[%s811] sm:$0xff]
    %1752 = vrot.lane.b32.xlu0 %v1749, 64
    %v1753 = vpop.permute.xlu0 %1752
    %v1754 = vsel %vm206, %v1753, 0
    %1756 = vmatprep.subr.mxu0 0.0
    %1757 = vmatpush1.msra.mxu0 0.0
    %1758 = vmatprep.subr.mxu0 0.0
    %1759 = vmatpush1.msra.mxu0 0.0
    %1760 = vmatprep.subr.mxu0 0.0
    %1761 = vmatpush1.msra.mxu0 0.0
    %1762 = vmatprep.subr.mxu0 0.0
    %1763 = vmatpush1.msra.mxu0 0.0
    %1764 = vmatprep.subr.mxu0 0.0
    %1765 = vmatpush1.msra.mxu0 0.0
    %1766 = vmatprep.subr.mxu0 0.0
    %1767 = vmatpush1.msra.mxu0 0.0
    %1768 = vmatprep.subr.mxu0 0.0
    %1769 = vmatpush1.msra.mxu0 0.0
    %1770 = vmatprep.subr.mxu0 0.0
    %1771 = vmatpush1.msra.mxu0 0.0
    %1772 = vmatprep.subr.mxu0 0.0
    %1773 = vmatpush1.msra.mxu0 0.0
    %1774 = vmatprep.subr.mxu0 0.0
    %1775 = vmatpush1.msra.mxu0 0.0
    %1776 = vmatprep.subr.mxu0 0.0
    %1777 = vmatpush1.msra.mxu0 0.0
    %1778 = vmatprep.subr.mxu0 0.0
    %1779 = vmatpush1.msra.mxu0 0.0
    %1780 = vmatprep.subr.mxu0 0.0
    %1781 = vmatpush1.msra.mxu0 %v1016
    %1782 = vmatprep.subr.mxu0 0.0
    %1783 = vmatpush1.msra.mxu0 %v1015
    %1784 = vmatprep.subr.mxu0 0.0
    %1785 = vmatpush1.msra.mxu0 %v1014
    %1786 = vmatprep.subr.mxu0 0.0
    %1787 = vmatpush1.msra.mxu0 %v1013
    %1788 = vmatprep.subr.mxu0 0.0
    %1789 = vmatpush2.msra.mxu0 0.0
    %1790 = vmatprep.subr.mxu0 0.0
    %1791 = vmatpush2.msra.mxu0 0.0
    %1792 = vmatprep.subr.mxu0 0.0
    %1793 = vmatpush2.msra.mxu0 0.0
    %1794 = vmatprep.subr.mxu0 0.0
    %1795 = vmatpush2.msra.mxu0 0.0
    %1796 = vmatprep.subr.mxu0 0.0
    %1797 = vmatpush2.msra.mxu0 0.0
    %1798 = vmatprep.subr.mxu0 0.0
    %1799 = vmatpush2.msra.mxu0 0.0
    %1800 = vmatprep.subr.mxu0 0.0
    %1801 = vmatpush2.msra.mxu0 0.0
    %1802 = vmatprep.subr.mxu0 0.0
    %1803 = vmatpush2.msra.mxu0 0.0
    %1804 = vmatprep.subr.mxu0 0.0
    %1805 = vmatpush2.msra.mxu0 0.0
    %1806 = vmatprep.subr.mxu0 0.0
    %1807 = vmatpush2.msra.mxu0 0.0
    %1808 = vmatprep.subr.mxu0 0.0
    %1809 = vmatpush2.msra.mxu0 0.0
    %1810 = vmatprep.subr.mxu0 0.0
    %1811 = vmatpush2.msra.mxu0 0.0
    %1812 = vmatprep.subr.mxu0 0.0
    %1813 = vmatpush2.msra.mxu0 0.0
    %1814 = vmatprep.subr.mxu0 0.0
    %1815 = vmatpush2.msra.mxu0 0.0
    %1816 = vmatprep.subr.mxu0 0.0
    %1817 = vmatpush2.msra.mxu0 0.0
    %1818 = vmatprep.subr.mxu0 0.0
    %1819 = vmatpush2.msra.mxu0 0.0
    %1820 = vmatprep.mubr.f32.mxu0 0.0
    %1821 = vmatmul.mubr.f32.gmra.mxu0 %v1754
    %v1822 = vpop.f32.mrf.mxu0
    %v1823 = vadd.f32 0.0, %v1822
    %v1824 = vpop.f32.mrf.mxu0
    %1825 = vdwg.mxu0
    %v1826 = vadd.f32 %v1750, %v1823
    %v1827 = vtanh.pop %v1826
    %v1828 = vmul.f32 %v1827, 0.5
    %v1829 = vadd.f32 %v1828, 0.5
    %v1830 = vmul.f32 %v1829, %v1743
    %1832 = vrot.lane.b32.xlu0 %v1827, 32
    %v1833 = vpop.permute.xlu0 %1832
    %v1835 = vmul.f32 %v1829, %v1833
    %1837 = vrot.lane.b32.xlu0 %v1835, 32
    %v1838 = vpop.permute.xlu0 %1837
    %v1840 = vadd.f32 %v1830, %v1838
    %v1841 = vtanh.pop %v1840
    %1843 = vrot.lane.b32.xlu0 %v1841, 32
    %v1844 = vpop.permute.xlu0 %1843
    %v1846 = vmul.f32 %v1829, %v1844
    %v1847 = vld [vmem:[%s912] sm:$0xff]
    %1849 = vrot.lane.b32.xlu0 %v1846, 64
    %v1850 = vpop.permute.xlu0 %1849
    %v1851 = vsel %vm206, %v1850, 0
    %1853 = vmatprep.subr.mxu0 0.0
    %1854 = vmatpush1.msra.mxu0 0.0
    %1855 = vmatprep.subr.mxu0 0.0
    %1856 = vmatpush1.msra.mxu0 0.0
    %1857 = vmatprep.subr.mxu0 0.0
    %1858 = vmatpush1.msra.mxu0 0.0
    %1859 = vmatprep.subr.mxu0 0.0
    %1860 = vmatpush1.msra.mxu0 0.0
    %1861 = vmatprep.subr.mxu0 0.0
    %1862 = vmatpush1.msra.mxu0 0.0
    %1863 = vmatprep.subr.mxu0 0.0
    %1864 = vmatpush1.msra.mxu0 0.0
    %1865 = vmatprep.subr.mxu0 0.0
    %1866 = vmatpush1.msra.mxu0 0.0
    %1867 = vmatprep.subr.mxu0 0.0
    %1868 = vmatpush1.msra.mxu0 0.0
    %1869 = vmatprep.subr.mxu0 0.0
    %1870 = vmatpush1.msra.mxu0 0.0
    %1871 = vmatprep.subr.mxu0 0.0
    %1872 = vmatpush1.msra.mxu0 0.0
    %1873 = vmatprep.subr.mxu0 0.0
    %1874 = vmatpush1.msra.mxu0 0.0
    %1875 = vmatprep.subr.mxu0 0.0
    %1876 = vmatpush1.msra.mxu0 0.0
    %1877 = vmatprep.subr.mxu0 0.0
    %1878 = vmatpush1.msra.mxu0 %v1016
    %1879 = vmatprep.subr.mxu0 0.0
    %1880 = vmatpush1.msra.mxu0 %v1015
    %1881 = vmatprep.subr.mxu0 0.0
    %1882 = vmatpush1.msra.mxu0 %v1014
    %1883 = vmatprep.subr.mxu0 0.0
    %1884 = vmatpush1.msra.mxu0 %v1013
    %1885 = vmatprep.subr.mxu0 0.0
    %1886 = vmatpush2.msra.mxu0 0.0
    %1887 = vmatprep.subr.mxu0 0.0
    %1888 = vmatpush2.msra.mxu0 0.0
    %1889 = vmatprep.subr.mxu0 0.0
    %1890 = vmatpush2.msra.mxu0 0.0
    %1891 = vmatprep.subr.mxu0 0.0
    %1892 = vmatpush2.msra.mxu0 0.0
    %1893 = vmatprep.subr.mxu0 0.0
    %1894 = vmatpush2.msra.mxu0 0.0
    %1895 = vmatprep.subr.mxu0 0.0
    %1896 = vmatpush2.msra.mxu0 0.0
    %1897 = vmatprep.subr.mxu0 0.0
    %1898 = vmatpush2.msra.mxu0 0.0
    %1899 = vmatprep.subr.mxu0 0.0
    %1900 = vmatpush2.msra.mxu0 0.0
    %1901 = vmatprep.subr.mxu0 0.0
    %1902 = vmatpush2.msra.mxu0 0.0
    %1903 = vmatprep.subr.mxu0 0.0
    %1904 = vmatpush2.msra.mxu0 0.0
    %1905 = vmatprep.subr.mxu0 0.0
    %1906 = vmatpush2.msra.mxu0 0.0
    %1907 = vmatprep.subr.mxu0 0.0
    %1908 = vmatpush2.msra.mxu0 0.0
    %1909 = vmatprep.subr.mxu0 0.0
    %1910 = vmatpush2.msra.mxu0 0.0
    %1911 = vmatprep.subr.mxu0 0.0
    %1912 = vmatpush2.msra.mxu0 0.0
    %1913 = vmatprep.subr.mxu0 0.0
    %1914 = vmatpush2.msra.mxu0 0.0
    %1915 = vmatprep.subr.mxu0 0.0
    %1916 = vmatpush2.msra.mxu0 0.0
    %1917 = vmatprep.mubr.f32.mxu0 0.0
    %1918 = vmatmul.mubr.f32.gmra.mxu0 %v1851
    %v1919 = vpop.f32.mrf.mxu0
    %v1920 = vadd.f32 0.0, %v1919
    %v1921 = vpop.f32.mrf.mxu0
    %1922 = vdwg.mxu0
    %v1923 = vadd.f32 %v1847, %v1920
    %v1924 = vtanh.pop %v1923
    %v1925 = vmul.f32 %v1924, 0.5
    %v1926 = vadd.f32 %v1925, 0.5
    %v1927 = vmul.f32 %v1926, %v1840
    %1929 = vrot.lane.b32.xlu0 %v1924, 32
    %v1930 = vpop.permute.xlu0 %1929
    %v1932 = vmul.f32 %v1926, %v1930
    %1934 = vrot.lane.b32.xlu0 %v1932, 32
    %v1935 = vpop.permute.xlu0 %1934
    %v1937 = vadd.f32 %v1927, %v1935
    %v1938 = vtanh.pop %v1937
    %1940 = vrot.lane.b32.xlu0 %v1938, 32
    %v1941 = vpop.permute.xlu0 %1940
    %v1943 = vmul.f32 %v1926, %v1941
    %v1944 = vld [vmem:[%s7] sm:$0x1]
    %v1946 = vlaneseq
    %v1947 = vshrl.u32 %v1946, 7
    %v1948 = vsub.s32 0, %v1947
    %v1949 = vrot.slane %v1944, %v1948
    %1950 = vrot.lane.b32.xlu0 %v1949, 64
    %v1951 = vpop.permute.xlu0 %1950
    %v1953 = vmul.f32 %v1943, %v1951
    %1955 = vrot.lane.b32.xlu0 %v1953, 64
    %v1956 = vpop.permute.xlu0 %1955
    %v1958 = vsel %vm206, %v1956, 0.0
    %1959 = vadd.xlane.f32.xlu0 %v1958
    %v1960 = vpop.xlane.xlu0 %1959
    %vm1961 = vcmask 7168
    %1962 = vst.msk [vmem:[%s8] sm:$0xff] %vm1961, %v1960
    // Predicated region
    $region38: #{tpu_custom_call.1} parent=1 // pred_check
      _
    $region39: #{tpu_custom_call.1} parent=1 // pred_check_branch
      %1964 = sbr.rel (0) target = $region41
    $region40: #{tpu_custom_call.1} parent=1 // pred_region
      _
    $region41: #{tpu_custom_call.1} parent=1 // pred_fallthru
      _
    // Predicated region
    $region42: #{tpu_custom_call.1} parent=1 // pred_check
      _
    $region43: #{tpu_custom_call.1} parent=1 // pred_check_branch
      %1966 = sbr.rel (0) target = $region45
    $region44: #{tpu_custom_call.1} parent=1 // pred_region
      _
    $region45: #{tpu_custom_call.1} parent=1 // pred_fallthru
      _
    %1967 = vsyncpa [#allocation5], 1

</llo_original>
